<compile_context>
chip_gen: v6e
topology: v6e:2x2x1
jax: 0.10.0
libtpu: 0.0.40
codegen_flags: <defaults>
</compile_context>

<pallas_src>
import jax
import jax.numpy as jnp
from jax.experimental import pallas as pl
from jax.experimental.pallas import tpu as pltpu


def mlp_kernel(x_ref, w1_ref, b1_ref, w2_ref, b2_ref, w3_ref, b3_ref, o_ref):
    x = x_ref[...]                                                     # (bmf, f*in)

    # MXU matmuls with f32 accumulation; bias + ReLU in f32; cast back to the
    # weight dtype (bf16 on the fast path, f32 on the exact path) between dots.
    h1 = jnp.dot(x, w1_ref[...], preferred_element_type=jnp.float32) + b1_ref[...]
    h1 = jnp.maximum(h1, 0.0).astype(w2_ref.dtype)

    # mask[0] is pre-folded into W2, mask[1] into W3 (exact transform).
    h2 = jnp.dot(h1, w2_ref[...], preferred_element_type=jnp.float32) + b2_ref[...]
    h2 = jnp.maximum(h2, 0.0).astype(w3_ref.dtype)

    y = jnp.dot(h2, w3_ref[...], preferred_element_type=jnp.float32) + b3_ref[...]
    o_ref[...] = y.astype(o_ref.dtype)


def _round_up(x, m):
    return ((x + m - 1) // m) * m


def _block_diag(w, f):
    """f copies of w along the diagonal of a (f*k, f*n) matrix."""
    if f == 1:
        return w
    k, n = w.shape
    bd = jnp.zeros((f * k, f * n), w.dtype)
    for i in range(f):
        bd = bd.at[i * k:(i + 1) * k, i * n:(i + 1) * n].set(w)
    return bd


def prepare_params(params, mask, *, fold=8, compute_dtype=jnp.bfloat16):
    """One-time parameter prep.

    1) Fold masks into W2/W3:  (h*m) @ W == h @ (m[:,None]*W)  (exact).
    2) Build block-diagonal weights / tiled biases for batch-folding factor
       `fold` (x is reshaped (B,D)->(B/fold, fold*D) in the wrapper, exact).
    3) Cast weights to `compute_dtype` (biases stay f32; accumulation is f32).
    If the mask changes, call prepare_params again.
    """
    w1, b1, w2, b2, w3, b3 = params
    w2 = mask[0][:, None] * w2
    w3 = mask[1][:, None] * w3

    w1 = _block_diag(w1, fold).astype(compute_dtype)
    w2 = _block_diag(w2, fold).astype(compute_dtype)
    w3 = _block_diag(w3, fold).astype(compute_dtype)
    b1 = jnp.tile(b1.astype(jnp.float32), (1, fold))
    b2 = jnp.tile(b2.astype(jnp.float32), (1, fold))
    b3 = jnp.tile(b3.astype(jnp.float32), (1, fold))
    return (w1, b1, w2, b2, w3, b3), fold


def regressor_control_g(x, prepared, *, bm=2048):
    """x: (B, input_dim) f32; prepared from prepare_params(). Returns (B, output_dim) f32."""
    (w1, b1, w2, b2, w3, b3), fold = prepared
    B, input_dim = x.shape
    Kf, Hf = w1.shape           # fold*input_dim, fold*hidden
    Nf = w3.shape[1]            # fold*output_dim
    assert Kf == fold * input_dim, "x feature dim does not match prepared params"
    output_dim = Nf // fold

    # Row alignment: tiles must be a multiple of 8 folded sublanes, and a
    # multiple of 64 raw rows (review: keep bm a 64-multiple).
    align = max(64, 8 * fold)
    B_aligned = _round_up(B, align)

    bm = max(align, (bm // align) * align)
    bm = min(bm, B_aligned)
    # If the whole batch fits in a single tile but is big enough, split into
    # two grid blocks so both v7x TensorCores get work.
    if bm >= B_aligned and B_aligned >= 2 * align:
        bm = _round_up(-(-B_aligned // 2), align)

    num_blocks = -(-B_aligned // bm)
    B_pad = num_blocks * bm
    if B_pad != B:
        x = jnp.pad(x, ((0, B_pad - B), (0, 0)))

    # Batch fold: row-major reshape (free) + cast to the weight compute dtype.
    xf = x.astype(w1.dtype).reshape(B_pad // fold, Kf)
    bmf = bm // fold

    const = lambda shape: pl.BlockSpec(shape, lambda i: (0, 0))

    out = pl.pallas_call(
        mlp_kernel,
        out_shape=jax.ShapeDtypeStruct((B_pad // fold, Nf), jnp.float32),
        grid=(num_blocks,),
        in_specs=[
            pl.BlockSpec((bmf, Kf), lambda i: (i, 0)),   # folded x tile
            const((Kf, Hf)),                             # W1 (block-diag)
            const((1, Hf)),                              # b1 (tiled)
            const((Hf, Hf)),                             # W2 (mask-folded, block-diag)
            const((1, Hf)),                              # b2
            const((Hf, Nf)),                             # W3 (mask-folded, block-diag)
            const((1, Nf)),                              # b3
        ],
        out_specs=pl.BlockSpec((bmf, Nf), lambda i: (i, 0)),
        compiler_params=pltpu.CompilerParams(
            dimension_semantics=("parallel",)),
    )(xf, w1, b1, w2, b2, w3, b3)

    out = out.reshape(B_pad, output_dim)
    if B_pad != B:
        out = out[:B]
    return out


def init_params(key, input_dim, output_dim, hidden=64):
    """Deterministic init mimicking PyTorch nn.Linear default (uniform +-1/sqrt(fan_in)).
    Weights stored as (in_features, out_features)."""
    ks = jax.random.split(key, 6)

    def linear(kw, kb, fan_in, fan_out):
        bound = 1.0 / jnp.sqrt(fan_in)
        w = jax.random.uniform(kw, (fan_in, fan_out), jnp.float32, -bound, bound)
        b = jax.random.uniform(kb, (1, fan_out), jnp.float32, -bound, bound)
        return w, b

    w1, b1 = linear(ks[0], ks[1], input_dim, hidden)
    w2, b2 = linear(ks[2], ks[3], hidden, hidden)
    w3, b3 = linear(ks[4], ks[5], hidden, output_dim)
    return (w1, b1, w2, b2, w3, b3)


def reference_forward(x, mask, params):
    """Pure-JAX reference with the original (unfolded) params + mask."""
    w1, b1, w2, b2, w3, b3 = params
    h1 = jax.nn.relu(x @ w1 + b1)
    h2 = jax.nn.relu((h1 * mask[0]) @ w2 + b2)
    return (h2 * mask[1]) @ w3 + b3


if __name__ == "__main__":
    input_dim = 32
    output_dim = 16
    hidden = 64

    key = jax.random.PRNGKey(0)
    k_x, k_m, k_p, k_x2 = jax.random.split(key, 4)

    mask = (jax.random.uniform(k_m, (2, hidden)) > 0.3).astype(jnp.float32)
    params = init_params(k_p, input_dim, output_dim, hidden)

    # Fast path: bf16 operands, batch-fold f=8 (128-lane output, big MXU tiles).
    prepared_fast = prepare_params(params, mask, fold=8, compute_dtype=jnp.bfloat16)

    # Test 1: small batch (padded to 64), single grid step, bf16 fast path.
    x = jax.random.normal(k_x, (40, input_dim), jnp.float32)
    out = jax.block_until_ready(regressor_control_g(x, prepared_fast))
    ref = reference_forward(x, mask, params)
    assert out.shape == (40, output_dim)
    assert jnp.allclose(out, ref, atol=5e-2, rtol=5e-2), "mismatch vs reference (test 1)"

    # Test 2: multi-block grid with batch padding, bf16 fast path.
    x2 = jax.random.normal(k_x2, (200, input_dim), jnp.float32)
    out2 = jax.block_until_ready(regressor_control_g(x2, prepared_fast, bm=128))
    ref2 = reference_forward(x2, mask, params)
    assert out2.shape == (200, output_dim)
    assert jnp.allclose(out2, ref2, atol=5e-2, rtol=5e-2), "mismatch vs reference (test 2)"

    # Test 3: exact path (f32, no batch folding), multi-block grid, tight tolerance.
    prepared_exact = prepare_params(params, mask, fold=1, compute_dtype=jnp.float32)
    out3 = jax.block_until_ready(regressor_control_g(x2, prepared_exact, bm=64))
    assert jnp.allclose(out3, ref2, atol=1e-5, rtol=1e-5), "mismatch vs reference (test 3)"

    print("KERNEL_OK")
</pallas_src>

<mosaic_0001>
module attributes {stable_mosaic.version = 11 : i64} {
  func.func @mlp_kernel(%arg0: i32, %arg1: memref<8x256xbf16, #tpu.memory_space<vmem>>, %arg2: memref<256x512xbf16, #tpu.memory_space<vmem>>, %arg3: memref<1x512xf32, #tpu.memory_space<vmem>>, %arg4: memref<512x512xbf16, #tpu.memory_space<vmem>>, %arg5: memref<1x512xf32, #tpu.memory_space<vmem>>, %arg6: memref<512x128xbf16, #tpu.memory_space<vmem>>, %arg7: memref<1x128xf32, #tpu.memory_space<vmem>>, %arg8: memref<8x128xf32, #tpu.memory_space<vmem>>) attributes {dimension_semantics = [#tpu.dimension_semantics<parallel>], iteration_bounds = array<i64: 1>, scalar_prefetch = 0 : i64, scratch_operands = 0 : i64, tpu.core_type = #tpu.core_type<tc>, window_params = [{transform_indices = @transform_0, window_bounds = array<i64: 8, 256>}, {pipeline_mode = #tpu.pipeline_mode<synchronous>, transform_indices = @transform_1, window_bounds = array<i64: 256, 512>}, {pipeline_mode = #tpu.pipeline_mode<synchronous>, transform_indices = @transform_2, window_bounds = array<i64: 1, 512>}, {pipeline_mode = #tpu.pipeline_mode<synchronous>, transform_indices = @transform_3, window_bounds = array<i64: 512, 512>}, {pipeline_mode = #tpu.pipeline_mode<synchronous>, transform_indices = @transform_4, window_bounds = array<i64: 1, 512>}, {pipeline_mode = #tpu.pipeline_mode<synchronous>, transform_indices = @transform_5, window_bounds = array<i64: 512, 128>}, {pipeline_mode = #tpu.pipeline_mode<synchronous>, transform_indices = @transform_6, window_bounds = array<i64: 1, 128>}, {transform_indices = @transform_7, window_bounds = array<i64: 8, 128>}]} {
    %c0 = arith.constant 0 : index
    %c0_0 = arith.constant 0 : index
    %0 = vector.load %arg1[%c0, %c0_0] : memref<8x256xbf16, #tpu.memory_space<vmem>>, vector<8x256xbf16>
    %c0_1 = arith.constant 0 : index
    %c0_2 = arith.constant 0 : index
    %1 = vector.load %arg2[%c0_1, %c0_2] : memref<256x512xbf16, #tpu.memory_space<vmem>>, vector<256x512xbf16>
    %cst = arith.constant dense<0.000000e+00> : vector<8x512xf32>
    %2 = tpu.matmul %0, %1, %cst {dimension_numbers = #tpu.dot_dimension_numbers<[1], [0], [0], [1], [0, 0, 1, 1], [], []>} : vector<8x256xbf16>, vector<256x512xbf16>, vector<8x512xf32> -> vector<8x512xf32>
    %c0_3 = arith.constant 0 : index
    %c0_4 = arith.constant 0 : index
    %3 = vector.load %arg3[%c0_3, %c0_4] : memref<1x512xf32, #tpu.memory_space<vmem>>, vector<1x512xf32>
    %4 = vector.broadcast %3 : vector<1x512xf32> to vector<8x512xf32>
    %5 = arith.addf %2, %4 : vector<8x512xf32>
    %cst_5 = arith.constant 0.000000e+00 : f32
    %6 = vector.broadcast %cst_5 : f32 to vector<8x512xf32>
    %7 = arith.maximumf %5, %6 : vector<8x512xf32>
    %8 = arith.truncf %7 : vector<8x512xf32> to vector<8x512xbf16>
    %c0_6 = arith.constant 0 : index
    %c0_7 = arith.constant 0 : index
    %9 = vector.load %arg4[%c0_6, %c0_7] : memref<512x512xbf16, #tpu.memory_space<vmem>>, vector<512x512xbf16>
    %cst_8 = arith.constant dense<0.000000e+00> : vector<8x512xf32>
    %10 = tpu.matmul %8, %9, %cst_8 {dimension_numbers = #tpu.dot_dimension_numbers<[1], [0], [0], [1], [0, 0, 1, 1], [], []>} : vector<8x512xbf16>, vector<512x512xbf16>, vector<8x512xf32> -> vector<8x512xf32>
    %c0_9 = arith.constant 0 : index
    %c0_10 = arith.constant 0 : index
    %11 = vector.load %arg5[%c0_9, %c0_10] : memref<1x512xf32, #tpu.memory_space<vmem>>, vector<1x512xf32>
    %12 = vector.broadcast %11 : vector<1x512xf32> to vector<8x512xf32>
    %13 = arith.addf %10, %12 : vector<8x512xf32>
    %cst_11 = arith.constant 0.000000e+00 : f32
    %14 = vector.broadcast %cst_11 : f32 to vector<8x512xf32>
    %15 = arith.maximumf %13, %14 : vector<8x512xf32>
    %16 = arith.truncf %15 : vector<8x512xf32> to vector<8x512xbf16>
    %c0_12 = arith.constant 0 : index
    %c0_13 = arith.constant 0 : index
    %17 = vector.load %arg6[%c0_12, %c0_13] : memref<512x128xbf16, #tpu.memory_space<vmem>>, vector<512x128xbf16>
    %cst_14 = arith.constant dense<0.000000e+00> : vector<8x128xf32>
    %18 = tpu.matmul %16, %17, %cst_14 {dimension_numbers = #tpu.dot_dimension_numbers<[1], [0], [0], [1], [0, 0, 1, 1], [], []>} : vector<8x512xbf16>, vector<512x128xbf16>, vector<8x128xf32> -> vector<8x128xf32>
    %c0_15 = arith.constant 0 : index
    %c0_16 = arith.constant 0 : index
    %19 = vector.load %arg7[%c0_15, %c0_16] : memref<1x128xf32, #tpu.memory_space<vmem>>, vector<1x128xf32>
    %20 = vector.broadcast %19 : vector<1x128xf32> to vector<8x128xf32>
    %21 = arith.addf %18, %20 : vector<8x128xf32>
    %c0_17 = arith.constant 0 : index
    %c0_18 = arith.constant 0 : index
    %22 = vector.load %arg8[%c0_17, %c0_18] : memref<8x128xf32, #tpu.memory_space<vmem>>, vector<8x128xf32>
    tpu.vector_store %arg8[%c0_17, %c0_18], %21 {strides = array<i32>} : memref<8x128xf32, #tpu.memory_space<vmem>>, vector<8x128xf32>,
    return
  }
  func.func @transform_0(%arg0: i32) -> (i32, i32) {
    %c0_i32 = arith.constant 0 : i32
    %c0_i32_0 = arith.constant 0 : i32
    return %arg0, %c0_i32 : i32, i32
  }
  func.func @transform_1(%arg0: i32) -> (i32, i32) {
    %c0_i32 = arith.constant 0 : i32
    %c0_i32_0 = arith.constant 0 : i32
    %c0_i32_1 = arith.constant 0 : i32
    return %c0_i32, %c0_i32_0 : i32, i32
  }
  func.func @transform_2(%arg0: i32) -> (i32, i32) {
    %c0_i32 = arith.constant 0 : i32
    %c0_i32_0 = arith.constant 0 : i32
    %c0_i32_1 = arith.constant 0 : i32
    return %c0_i32, %c0_i32_0 : i32, i32
  }
  func.func @transform_3(%arg0: i32) -> (i32, i32) {
    %c0_i32 = arith.constant 0 : i32
    %c0_i32_0 = arith.constant 0 : i32
    %c0_i32_1 = arith.constant 0 : i32
    return %c0_i32, %c0_i32_0 : i32, i32
  }
  func.func @transform_4(%arg0: i32) -> (i32, i32) {
    %c0_i32 = arith.constant 0 : i32
    %c0_i32_0 = arith.constant 0 : i32
    %c0_i32_1 = arith.constant 0 : i32
    return %c0_i32, %c0_i32_0 : i32, i32
  }
  func.func @transform_5(%arg0: i32) -> (i32, i32) {
    %c0_i32 = arith.constant 0 : i32
    %c0_i32_0 = arith.constant 0 : i32
    %c0_i32_1 = arith.constant 0 : i32
    return %c0_i32, %c0_i32_0 : i32, i32
  }
  func.func @transform_6(%arg0: i32) -> (i32, i32) {
    %c0_i32 = arith.constant 0 : i32
    %c0_i32_0 = arith.constant 0 : i32
    %c0_i32_1 = arith.constant 0 : i32
    return %c0_i32, %c0_i32_0 : i32, i32
  }
  func.func @transform_7(%arg0: i32) -> (i32, i32) {
    %c0_i32 = arith.constant 0 : i32
    %c0_i32_0 = arith.constant 0 : i32
    return %arg0, %c0_i32 : i32, i32
  }
}

</mosaic_0001>

<llo_original>
// kernel: tpu_custom_call.1
$region0: #{tpu_custom_call.1}
  #allocation0 [shape = 'u32[]', space=smem, size = 0x4, offset = 0x4, fixed_abs, tag = 'smem constant byte address 0x4 - core index']
  #allocation1 [shape = 'u32[144,128]{1,0:T(1,128)}', space=vmem, size = 0x12000, scoped, tag = 'internal scratch']
  %s0 = inlined_call_operand.hbm [shape: bf16[8,256], index: 0, kind: input, shape index: {}]
  %s1 = inlined_call_operand.hbm [shape: bf16[256,512], index: 1, kind: input, shape index: {}]
  %s2 = inlined_call_operand.hbm [shape: f32[1,512], index: 2, kind: input, shape index: {}]
  %s3 = inlined_call_operand.hbm [shape: bf16[512,512], index: 3, kind: input, shape index: {}]
  %s4 = inlined_call_operand.vmem [shape: f32[1,512], index: 4, kind: input, shape index: {}]
  %s5 = inlined_call_operand.hbm [shape: bf16[512,128], index: 5, kind: input, shape index: {}]
  %s6 = inlined_call_operand.vmem [shape: f32[1,128], index: 6, kind: input, shape index: {}]
  %s7 = inlined_call_operand.hbm [shape: f32[8,128], index: 7, kind: output, shape index: {}]
  %s8 = sld [smem:[#allocation0]]
  $region58: #{tpu_custom_call.1} parent=0
    _
  %s10 = ssub.s32 1, %s8
  %s11 = scalar_select 0, %s10, %s8
  $region1: #{tpu_custom_call.1} parent=0
    #allocation2 [shape = 'u8[4096]{0}', space=vmem, size = 0x1000, scoped, tag = 'input window, operand 0, single buffered']
    #allocation3 [shape = 's32[1]{0}', space=sflag, size = 0x4, scoped, tag = 'scoped memory for tpu_custom_call.1']
    #allocation4 [shape = 's32[1]{0}', space=sflag, size = 0x4, scoped, tag = 'scoped memory for tpu_custom_call.1']
    #allocation5 [shape = 'u8[262144]{0}', space=vmem, size = 0x40000, scoped, tag = 'input window, operand 1, single buffered']
    #allocation6 [shape = 's32[1]{0}', space=sflag, size = 0x4, scoped, tag = 'scoped memory for tpu_custom_call.1']
    #allocation7 [shape = 'u8[2048]{0}', space=vmem, size = 0x800, scoped, tag = 'input window, operand 2, single buffered']
    #allocation8 [shape = 'u8[524288]{0}', space=vmem, size = 0x80000, scoped, tag = 'input window, operand 3, single buffered']
    #allocation9 [shape = 's32[1]{0}', space=sflag, size = 0x4, scoped, tag = 'scoped memory for tpu_custom_call.1']
    #allocation10 [shape = 'u8[131072]{0}', space=vmem, size = 0x20000, scoped, tag = 'input window, operand 5, single buffered']
    #allocation11 [shape = 'u8[4096]{0}', space=vmem, size = 0x1000, scoped, tag = 'output window, operand 0, single buffered']
    %12 = vsyncpa [#allocation3], 0
    %13 = vsyncpa [#allocation6], 0
    %14 = vsyncpa [#allocation9], 0
    %15 = vsyncpa [#allocation4], 0
    // Predicated region
    $region2: #{tpu_custom_call.1} parent=1 // pred_check
      _
    $region3: #{tpu_custom_call.1} parent=1 // pred_check_branch
      %17 = sbr.rel (0) target = $region5
    $region4: #{tpu_custom_call.1} parent=1 // pred_region
      %s19 = ssub.s32 128, 128
      %20 = vsyncadd [#allocation3], %s19
      %s22 = sshll.u32 [#allocation2], 4
      %s23 = int_to_ptr.vmem [resolvable:$true] %s22
      %25 = dma.hbm_to_vmem [thread:$0]  %s0, 128, %s23, [#allocation3]
    $region5: #{tpu_custom_call.1} parent=1 // pred_fallthru
      _
    // Predicated region
    $region6: #{tpu_custom_call.1} parent=1 // pred_check
      _
    $region7: #{tpu_custom_call.1} parent=1 // pred_check_branch
      %27 = sbr.rel (0) target = $region9
    $region8: #{tpu_custom_call.1} parent=1 // pred_region
      %s29 = ssub.s32 8192, 8192
      %30 = vsyncadd [#allocation6], %s29
      %s31 = sshll.u32 [#allocation5], 4
      %s32 = int_to_ptr.vmem [resolvable:$true] %s31
      %37 = dma.hbm_to_vmem [thread:$0]  %s1, 8192, %s32, [#allocation6], 256, 256, 16
    $region9: #{tpu_custom_call.1} parent=1 // pred_fallthru
      _
    // Predicated region
    $region10: #{tpu_custom_call.1} parent=1 // pred_check
      _
    $region11: #{tpu_custom_call.1} parent=1 // pred_check_branch
      %39 = sbr.rel (0) target = $region13
    $region12: #{tpu_custom_call.1} parent=1 // pred_region
      %s41 = ssub.s32 64, 64
      %42 = vsyncadd [#allocation6], %s41
      %s44 = sshll.u32 [#allocation7], 4
      %s45 = int_to_ptr.vmem [resolvable:$true] %s44
      %47 = dma.hbm_to_vmem [thread:$0]  %s2, 64, %s45, [#allocation6]
    $region13: #{tpu_custom_call.1} parent=1 // pred_fallthru
      _
    // Predicated region
    $region14: #{tpu_custom_call.1} parent=1 // pred_check
      _
    $region15: #{tpu_custom_call.1} parent=1 // pred_check_branch
      %49 = sbr.rel (0) target = $region17
    $region16: #{tpu_custom_call.1} parent=1 // pred_region
      %s51 = ssub.s32 16384, 16384
      %52 = vsyncadd [#allocation9], %s51
      %s53 = sshll.u32 [#allocation8], 4
      %s54 = int_to_ptr.vmem [resolvable:$true] %s53
      %59 = dma.hbm_to_vmem [thread:$0]  %s3, 16384, %s54, [#allocation9], 256, 256, 16
    $region17: #{tpu_custom_call.1} parent=1 // pred_fallthru
      _
    // Predicated region
    $region18: #{tpu_custom_call.1} parent=1 // pred_check
      _
    $region19: #{tpu_custom_call.1} parent=1 // pred_check_branch
      %61 = sbr.rel (0) target = $region21
    $region20: #{tpu_custom_call.1} parent=1 // pred_region
      _
    $region21: #{tpu_custom_call.1} parent=1 // pred_fallthru
      _
    // Predicated region
    $region22: #{tpu_custom_call.1} parent=1 // pred_check
      _
    $region23: #{tpu_custom_call.1} parent=1 // pred_check_branch
      %63 = sbr.rel (0) target = $region25
    $region24: #{tpu_custom_call.1} parent=1 // pred_region
      %s65 = ssub.s32 4096, 4096
      %66 = vsyncadd [#allocation9], %s65
      %s67 = sshll.u32 [#allocation10], 4
      %s68 = int_to_ptr.vmem [resolvable:$true] %s67
      %73 = dma.hbm_to_vmem [thread:$0]  %s5, 4096, %s68, [#allocation9], 64, 64, 4
    $region25: #{tpu_custom_call.1} parent=1 // pred_fallthru
      _
    // Predicated region
    $region26: #{tpu_custom_call.1} parent=1 // pred_check
      _
    $region27: #{tpu_custom_call.1} parent=1 // pred_check_branch
      %75 = sbr.rel (0) target = $region29
    $region28: #{tpu_custom_call.1} parent=1 // pred_region
      _
    $region29: #{tpu_custom_call.1} parent=1 // pred_fallthru
      _
    // Predicated region
    $region30: #{tpu_custom_call.1} parent=1 // pred_check
      _
    $region31: #{tpu_custom_call.1} parent=1 // pred_check_branch
      %77 = sbr.rel (0) target = $region33
    $region32: #{tpu_custom_call.1} parent=1 // pred_region
      %78 = dma.done [#allocation3], 128
    $region33: #{tpu_custom_call.1} parent=1 // pred_fallthru
      _
    // Predicated region
    $region34: #{tpu_custom_call.1} parent=1 // pred_check
      _
    $region35: #{tpu_custom_call.1} parent=1 // pred_check_branch
      %80 = sbr.rel (0) target = $region37
    $region36: #{tpu_custom_call.1} parent=1 // pred_region
      %81 = dma.done [#allocation6], 8192
    $region37: #{tpu_custom_call.1} parent=1 // pred_fallthru
      _
    // Predicated region
    $region38: #{tpu_custom_call.1} parent=1 // pred_check
      _
    $region39: #{tpu_custom_call.1} parent=1 // pred_check_branch
      %83 = sbr.rel (0) target = $region41
    $region40: #{tpu_custom_call.1} parent=1 // pred_region
      %84 = dma.done [#allocation6], 64
    $region41: #{tpu_custom_call.1} parent=1 // pred_fallthru
      _
    // Predicated region
    $region42: #{tpu_custom_call.1} parent=1 // pred_check
      _
    $region43: #{tpu_custom_call.1} parent=1 // pred_check_branch
      %86 = sbr.rel (0) target = $region45
    $region44: #{tpu_custom_call.1} parent=1 // pred_region
      %87 = dma.done [#allocation9], 16384
    $region45: #{tpu_custom_call.1} parent=1 // pred_fallthru
      _
    // Predicated region
    $region46: #{tpu_custom_call.1} parent=1 // pred_check
      _
    $region47: #{tpu_custom_call.1} parent=1 // pred_check_branch
      %89 = sbr.rel (0) target = $region49
    $region48: #{tpu_custom_call.1} parent=1 // pred_region
      %90 = dma.done [#allocation9], 4096
    $region49: #{tpu_custom_call.1} parent=1 // pred_fallthru
      _
    %v92 = vld [vmem:[#allocation2] sm:$0xff]
    %v93 = vld [vmem:[#allocation5] sm:$0xff]
    %v94 = vld [vmem:[#allocation5 + $0x8] sm:$0xff]
    %v95 = vld [vmem:[#allocation5 + $0x10] sm:$0xff]
    %v96 = vld [vmem:[#allocation5 + $0x18] sm:$0xff]
    %v97 = vld [vmem:[#allocation5 + $0x20] sm:$0xff]
    %v98 = vld [vmem:[#allocation5 + $0x28] sm:$0xff]
    %v99 = vld [vmem:[#allocation5 + $0x30] sm:$0xff]
    %v100 = vld [vmem:[#allocation5 + $0x38] sm:$0xff]
    %v101 = vld [vmem:[#allocation5 + $0x40] sm:$0xff]
    %v102 = vld [vmem:[#allocation5 + $0x48] sm:$0xff]
    %v103 = vld [vmem:[#allocation5 + $0x50] sm:$0xff]
    %v104 = vld [vmem:[#allocation5 + $0x58] sm:$0xff]
    %v105 = vld [vmem:[#allocation5 + $0x60] sm:$0xff]
    %v106 = vld [vmem:[#allocation5 + $0x68] sm:$0xff]
    %v107 = vld [vmem:[#allocation5 + $0x70] sm:$0xff]
    %v108 = vld [vmem:[#allocation5 + $0x78] sm:$0xff]
    %v109 = vld [vmem:[#allocation5 + $0x80] sm:$0xff]
    %v110 = vld [vmem:[#allocation5 + $0x88] sm:$0xff]
    %v111 = vld [vmem:[#allocation5 + $0x90] sm:$0xff]
    %v112 = vld [vmem:[#allocation5 + $0x98] sm:$0xff]
    %v113 = vld [vmem:[#allocation5 + $0xa0] sm:$0xff]
    %v114 = vld [vmem:[#allocation5 + $0xa8] sm:$0xff]
    %v115 = vld [vmem:[#allocation5 + $0xb0] sm:$0xff]
    %v116 = vld [vmem:[#allocation5 + $0xb8] sm:$0xff]
    %v117 = vld [vmem:[#allocation5 + $0xc0] sm:$0xff]
    %v118 = vld [vmem:[#allocation5 + $0xc8] sm:$0xff]
    %v119 = vld [vmem:[#allocation5 + $0xd0] sm:$0xff]
    %v120 = vld [vmem:[#allocation5 + $0xd8] sm:$0xff]
    %v121 = vld [vmem:[#allocation5 + $0xe0] sm:$0xff]
    %v122 = vld [vmem:[#allocation5 + $0xe8] sm:$0xff]
    %v123 = vld [vmem:[#allocation5 + $0xf0] sm:$0xff]
    %v124 = vld [vmem:[#allocation5 + $0xf8] sm:$0xff]
    %v125 = vld [vmem:[#allocation5 + $0x100] sm:$0xff]
    %v126 = vld [vmem:[#allocation5 + $0x108] sm:$0xff]
    %v127 = vld [vmem:[#allocation5 + $0x110] sm:$0xff]
    %v128 = vld [vmem:[#allocation5 + $0x118] sm:$0xff]
    %v129 = vld [vmem:[#allocation5 + $0x120] sm:$0xff]
    %v130 = vld [vmem:[#allocation5 + $0x128] sm:$0xff]
    %v131 = vld [vmem:[#allocation5 + $0x130] sm:$0xff]
    %v132 = vld [vmem:[#allocation5 + $0x138] sm:$0xff]
    %v133 = vld [vmem:[#allocation5 + $0x140] sm:$0xff]
    %v134 = vld [vmem:[#allocation5 + $0x148] sm:$0xff]
    %v135 = vld [vmem:[#allocation5 + $0x150] sm:$0xff]
    %v136 = vld [vmem:[#allocation5 + $0x158] sm:$0xff]
    %v137 = vld [vmem:[#allocation5 + $0x160] sm:$0xff]
    %v138 = vld [vmem:[#allocation5 + $0x168] sm:$0xff]
    %v139 = vld [vmem:[#allocation5 + $0x170] sm:$0xff]
    %v140 = vld [vmem:[#allocation5 + $0x178] sm:$0xff]
    %v141 = vld [vmem:[#allocation5 + $0x180] sm:$0xff]
    %v142 = vld [vmem:[#allocation5 + $0x188] sm:$0xff]
    %v143 = vld [vmem:[#allocation5 + $0x190] sm:$0xff]
    %v144 = vld [vmem:[#allocation5 + $0x198] sm:$0xff]
    %v145 = vld [vmem:[#allocation5 + $0x1a0] sm:$0xff]
    %v146 = vld [vmem:[#allocation5 + $0x1a8] sm:$0xff]
    %v147 = vld [vmem:[#allocation5 + $0x1b0] sm:$0xff]
    %v148 = vld [vmem:[#allocation5 + $0x1b8] sm:$0xff]
    %v149 = vld [vmem:[#allocation5 + $0x1c0] sm:$0xff]
    %v150 = vld [vmem:[#allocation5 + $0x1c8] sm:$0xff]
    %v151 = vld [vmem:[#allocation5 + $0x1d0] sm:$0xff]
    %v152 = vld [vmem:[#allocation5 + $0x1d8] sm:$0xff]
    %v153 = vld [vmem:[#allocation5 + $0x1e0] sm:$0xff]
    %v154 = vld [vmem:[#allocation5 + $0x1e8] sm:$0xff]
    %v155 = vld [vmem:[#allocation5 + $0x1f0] sm:$0xff]
    %v156 = vld [vmem:[#allocation5 + $0x1f8] sm:$0xff]
    %v157 = vld [vmem:[#allocation7] sm:$0xf]
    %v159 = vlaneseq
    %v160 = vshrl.u32 %v159, 7
    %v161 = vsub.s32 0, %v160
    %v162 = vrot.slane %v157, %v161
    %v163 = vlaneseq
    %v164 = vshrl.u32 %v163, 7
    %v165 = vsub.s32 1, %v164
    %v166 = vrot.slane %v157, %v165
    %v167 = vlaneseq
    %v168 = vshrl.u32 %v167, 7
    %v169 = vsub.s32 2, %v168
    %v170 = vrot.slane %v157, %v169
    %v171 = vlaneseq
    %v172 = vshrl.u32 %v171, 7
    %v173 = vsub.s32 3, %v172
    %v174 = vrot.slane %v157, %v173
    %v180 = vunpack.c.l.b16 %v92
    %v181 = vunpack.c.h.b16 %v92
    %v182 = vpack.c.b16 %v180, %v180
    %v183 = vpack.c.b16 %v181, %v181
    %v250 = vunpack.c.l.b16 %v93
    %v251 = vunpack.c.h.b16 %v93
    %v252 = vunpack.c.l.b16 %v94
    %v253 = vunpack.c.h.b16 %v94
    %v254 = vunpack.c.l.b16 %v95
    %v255 = vunpack.c.h.b16 %v95
    %v256 = vunpack.c.l.b16 %v96
    %v257 = vunpack.c.h.b16 %v96
    %v258 = vunpack.c.l.b16 %v97
    %v259 = vunpack.c.h.b16 %v97
    %v260 = vunpack.c.l.b16 %v98
    %v261 = vunpack.c.h.b16 %v98
    %v262 = vunpack.c.l.b16 %v99
    %v263 = vunpack.c.h.b16 %v99
    %v264 = vunpack.c.l.b16 %v100
    %v265 = vunpack.c.h.b16 %v100
    %v266 = vunpack.c.l.b16 %v101
    %v267 = vunpack.c.h.b16 %v101
    %v268 = vunpack.c.l.b16 %v102
    %v269 = vunpack.c.h.b16 %v102
    %v270 = vunpack.c.l.b16 %v103
    %v271 = vunpack.c.h.b16 %v103
    %v272 = vunpack.c.l.b16 %v104
    %v273 = vunpack.c.h.b16 %v104
    %v274 = vunpack.c.l.b16 %v105
    %v275 = vunpack.c.h.b16 %v105
    %v276 = vunpack.c.l.b16 %v106
    %v277 = vunpack.c.h.b16 %v106
    %v278 = vunpack.c.l.b16 %v107
    %v279 = vunpack.c.h.b16 %v107
    %v280 = vunpack.c.l.b16 %v108
    %v281 = vunpack.c.h.b16 %v108
    %v282 = vunpack.c.l.b16 %v109
    %v283 = vunpack.c.h.b16 %v109
    %v284 = vunpack.c.l.b16 %v110
    %v285 = vunpack.c.h.b16 %v110
    %v286 = vunpack.c.l.b16 %v111
    %v287 = vunpack.c.h.b16 %v111
    %v288 = vunpack.c.l.b16 %v112
    %v289 = vunpack.c.h.b16 %v112
    %v290 = vunpack.c.l.b16 %v113
    %v291 = vunpack.c.h.b16 %v113
    %v292 = vunpack.c.l.b16 %v114
    %v293 = vunpack.c.h.b16 %v114
    %v294 = vunpack.c.l.b16 %v115
    %v295 = vunpack.c.h.b16 %v115
    %v296 = vunpack.c.l.b16 %v116
    %v297 = vunpack.c.h.b16 %v116
    %v298 = vunpack.c.l.b16 %v117
    %v299 = vunpack.c.h.b16 %v117
    %v300 = vunpack.c.l.b16 %v118
    %v301 = vunpack.c.h.b16 %v118
    %v302 = vunpack.c.l.b16 %v119
    %v303 = vunpack.c.h.b16 %v119
    %v304 = vunpack.c.l.b16 %v120
    %v305 = vunpack.c.h.b16 %v120
    %v306 = vunpack.c.l.b16 %v121
    %v307 = vunpack.c.h.b16 %v121
    %v308 = vunpack.c.l.b16 %v122
    %v309 = vunpack.c.h.b16 %v122
    %v310 = vunpack.c.l.b16 %v123
    %v311 = vunpack.c.h.b16 %v123
    %v312 = vunpack.c.l.b16 %v124
    %v313 = vunpack.c.h.b16 %v124
    %v314 = vunpack.c.l.b16 %v125
    %v315 = vunpack.c.h.b16 %v125
    %v316 = vunpack.c.l.b16 %v126
    %v317 = vunpack.c.h.b16 %v126
    %v318 = vunpack.c.l.b16 %v127
    %v319 = vunpack.c.h.b16 %v127
    %v320 = vunpack.c.l.b16 %v128
    %v321 = vunpack.c.h.b16 %v128
    %v322 = vunpack.c.l.b16 %v129
    %v323 = vunpack.c.h.b16 %v129
    %v324 = vunpack.c.l.b16 %v130
    %v325 = vunpack.c.h.b16 %v130
    %v326 = vunpack.c.l.b16 %v131
    %v327 = vunpack.c.h.b16 %v131
    %v328 = vunpack.c.l.b16 %v132
    %v329 = vunpack.c.h.b16 %v132
    %v330 = vunpack.c.l.b16 %v133
    %v331 = vunpack.c.h.b16 %v133
    %v332 = vunpack.c.l.b16 %v134
    %v333 = vunpack.c.h.b16 %v134
    %v334 = vunpack.c.l.b16 %v135
    %v335 = vunpack.c.h.b16 %v135
    %v336 = vunpack.c.l.b16 %v136
    %v337 = vunpack.c.h.b16 %v136
    %v338 = vunpack.c.l.b16 %v137
    %v339 = vunpack.c.h.b16 %v137
    %v340 = vunpack.c.l.b16 %v138
    %v341 = vunpack.c.h.b16 %v138
    %v342 = vunpack.c.l.b16 %v139
    %v343 = vunpack.c.h.b16 %v139
    %v344 = vunpack.c.l.b16 %v140
    %v345 = vunpack.c.h.b16 %v140
    %v346 = vunpack.c.l.b16 %v141
    %v347 = vunpack.c.h.b16 %v141
    %v348 = vunpack.c.l.b16 %v142
    %v349 = vunpack.c.h.b16 %v142
    %v350 = vunpack.c.l.b16 %v143
    %v351 = vunpack.c.h.b16 %v143
    %v352 = vunpack.c.l.b16 %v144
    %v353 = vunpack.c.h.b16 %v144
    %v354 = vunpack.c.l.b16 %v145
    %v355 = vunpack.c.h.b16 %v145
    %v356 = vunpack.c.l.b16 %v146
    %v357 = vunpack.c.h.b16 %v146
    %v358 = vunpack.c.l.b16 %v147
    %v359 = vunpack.c.h.b16 %v147
    %v360 = vunpack.c.l.b16 %v148
    %v361 = vunpack.c.h.b16 %v148
    %v362 = vunpack.c.l.b16 %v149
    %v363 = vunpack.c.h.b16 %v149
    %v364 = vunpack.c.l.b16 %v150
    %v365 = vunpack.c.h.b16 %v150
    %v366 = vunpack.c.l.b16 %v151
    %v367 = vunpack.c.h.b16 %v151
    %v368 = vunpack.c.l.b16 %v152
    %v369 = vunpack.c.h.b16 %v152
    %v370 = vunpack.c.l.b16 %v153
    %v371 = vunpack.c.h.b16 %v153
    %v372 = vunpack.c.l.b16 %v154
    %v373 = vunpack.c.h.b16 %v154
    %v374 = vunpack.c.l.b16 %v155
    %v375 = vunpack.c.h.b16 %v155
    %v376 = vunpack.c.l.b16 %v156
    %v377 = vunpack.c.h.b16 %v156
    %v378 = vpack.c.b16 %v254, %v250
    %v379 = vpack.c.b16 %v255, %v251
    %v380 = vpack.c.b16 %v256, %v252
    %v381 = vpack.c.b16 %v257, %v253
    %v382 = vpack.c.b16 %v262, %v258
    %v383 = vpack.c.b16 %v263, %v259
    %v384 = vpack.c.b16 %v264, %v260
    %v385 = vpack.c.b16 %v265, %v261
    %v386 = vpack.c.b16 %v270, %v266
    %v387 = vpack.c.b16 %v271, %v267
    %v388 = vpack.c.b16 %v272, %v268
    %v389 = vpack.c.b16 %v273, %v269
    %v390 = vpack.c.b16 %v278, %v274
    %v391 = vpack.c.b16 %v279, %v275
    %v392 = vpack.c.b16 %v280, %v276
    %v393 = vpack.c.b16 %v281, %v277
    %v394 = vpack.c.b16 %v286, %v282
    %v395 = vpack.c.b16 %v287, %v283
    %v396 = vpack.c.b16 %v288, %v284
    %v397 = vpack.c.b16 %v289, %v285
    %v398 = vpack.c.b16 %v294, %v290
    %v399 = vpack.c.b16 %v295, %v291
    %v400 = vpack.c.b16 %v296, %v292
    %v401 = vpack.c.b16 %v297, %v293
    %v402 = vpack.c.b16 %v302, %v298
    %v403 = vpack.c.b16 %v303, %v299
    %v404 = vpack.c.b16 %v304, %v300
    %v405 = vpack.c.b16 %v305, %v301
    %v406 = vpack.c.b16 %v310, %v306
    %v407 = vpack.c.b16 %v311, %v307
    %v408 = vpack.c.b16 %v312, %v308
    %v409 = vpack.c.b16 %v313, %v309
    %v410 = vpack.c.b16 %v318, %v314
    %v411 = vpack.c.b16 %v319, %v315
    %v412 = vpack.c.b16 %v320, %v316
    %v413 = vpack.c.b16 %v321, %v317
    %v414 = vpack.c.b16 %v326, %v322
    %v415 = vpack.c.b16 %v327, %v323
    %v416 = vpack.c.b16 %v328, %v324
    %v417 = vpack.c.b16 %v329, %v325
    %v418 = vpack.c.b16 %v334, %v330
    %v419 = vpack.c.b16 %v335, %v331
    %v420 = vpack.c.b16 %v336, %v332
    %v421 = vpack.c.b16 %v337, %v333
    %v422 = vpack.c.b16 %v342, %v338
    %v423 = vpack.c.b16 %v343, %v339
    %v424 = vpack.c.b16 %v344, %v340
    %v425 = vpack.c.b16 %v345, %v341
    %v426 = vpack.c.b16 %v350, %v346
    %v427 = vpack.c.b16 %v351, %v347
    %v428 = vpack.c.b16 %v352, %v348
    %v429 = vpack.c.b16 %v353, %v349
    %v430 = vpack.c.b16 %v358, %v354
    %v431 = vpack.c.b16 %v359, %v355
    %v432 = vpack.c.b16 %v360, %v356
    %v433 = vpack.c.b16 %v361, %v357
    %v434 = vpack.c.b16 %v366, %v362
    %v435 = vpack.c.b16 %v367, %v363
    %v436 = vpack.c.b16 %v368, %v364
    %v437 = vpack.c.b16 %v369, %v365
    %v438 = vpack.c.b16 %v374, %v370
    %v439 = vpack.c.b16 %v375, %v371
    %v440 = vpack.c.b16 %v376, %v372
    %v441 = vpack.c.b16 %v377, %v373
    %506 = vmatprep.subr.bf16.mxu0 %v407
    %507 = vmatpush1.bf16.msra.mxu0 %v406
    %508 = vmatprep.subr.bf16.mxu0 %v403
    %509 = vmatpush1.bf16.msra.mxu0 %v402
    %510 = vmatprep.subr.bf16.mxu0 %v399
    %511 = vmatpush1.bf16.msra.mxu0 %v398
    %512 = vmatprep.subr.bf16.mxu0 %v395
    %513 = vmatpush1.bf16.msra.mxu0 %v394
    %514 = vmatprep.subr.bf16.mxu0 %v391
    %515 = vmatpush1.bf16.msra.mxu0 %v390
    %516 = vmatprep.subr.bf16.mxu0 %v387
    %517 = vmatpush1.bf16.msra.mxu0 %v386
    %518 = vmatprep.subr.bf16.mxu0 %v383
    %519 = vmatpush1.bf16.msra.mxu0 %v382
    %520 = vmatprep.subr.bf16.mxu0 %v379
    %521 = vmatpush1.bf16.msra.mxu0 %v378
    %522 = vmatprep.subr.bf16.mxu0 %v439
    %523 = vmatpush2.bf16.msra.mxu0 %v438
    %524 = vmatprep.subr.bf16.mxu0 %v435
    %525 = vmatpush2.bf16.msra.mxu0 %v434
    %526 = vmatprep.subr.bf16.mxu0 %v431
    %527 = vmatpush2.bf16.msra.mxu0 %v430
    %528 = vmatprep.subr.bf16.mxu0 %v427
    %529 = vmatpush2.bf16.msra.mxu0 %v426
    %530 = vmatprep.subr.bf16.mxu0 %v423
    %531 = vmatpush2.bf16.msra.mxu0 %v422
    %532 = vmatprep.subr.bf16.mxu0 %v419
    %533 = vmatpush2.bf16.msra.mxu0 %v418
    %534 = vmatprep.subr.bf16.mxu0 %v415
    %535 = vmatpush2.bf16.msra.mxu0 %v414
    %536 = vmatprep.subr.bf16.mxu0 %v411
    %537 = vmatpush2.bf16.msra.mxu0 %v410
    %538 = vmatprep.mubr.bf16.mxu0 %v183
    %539 = vmatmul.mubr.bf16.gmra.mxu0 %v182
    %v540 = vpop.f32.mrf.mxu0
    %v541 = vadd.f32 %v162, %v540
    %v542 = vpop.f32.mrf.mxu0
    %v543 = vadd.f32 %v166, %v542
    %v544 = vpop.f32.mrf.mxu0
    %v545 = vpop.f32.mrf.mxu0
    %546 = vdwg.mxu0
    %547 = vmatprep.subr.bf16.mxu0 %v409
    %548 = vmatpush1.bf16.msra.mxu0 %v408
    %549 = vmatprep.subr.bf16.mxu0 %v405
    %550 = vmatpush1.bf16.msra.mxu0 %v404
    %551 = vmatprep.subr.bf16.mxu0 %v401
    %552 = vmatpush1.bf16.msra.mxu0 %v400
    %553 = vmatprep.subr.bf16.mxu0 %v397
    %554 = vmatpush1.bf16.msra.mxu0 %v396
    %555 = vmatprep.subr.bf16.mxu0 %v393
    %556 = vmatpush1.bf16.msra.mxu0 %v392
    %557 = vmatprep.subr.bf16.mxu0 %v389
    %558 = vmatpush1.bf16.msra.mxu0 %v388
    %559 = vmatprep.subr.bf16.mxu0 %v385
    %560 = vmatpush1.bf16.msra.mxu0 %v384
    %561 = vmatprep.subr.bf16.mxu0 %v381
    %562 = vmatpush1.bf16.msra.mxu0 %v380
    %563 = vmatprep.subr.bf16.mxu0 %v441
    %564 = vmatpush2.bf16.msra.mxu0 %v440
    %565 = vmatprep.subr.bf16.mxu0 %v437
    %566 = vmatpush2.bf16.msra.mxu0 %v436
    %567 = vmatprep.subr.bf16.mxu0 %v433
    %568 = vmatpush2.bf16.msra.mxu0 %v432
    %569 = vmatprep.subr.bf16.mxu0 %v429
    %570 = vmatpush2.bf16.msra.mxu0 %v428
    %571 = vmatprep.subr.bf16.mxu0 %v425
    %572 = vmatpush2.bf16.msra.mxu0 %v424
    %573 = vmatprep.subr.bf16.mxu0 %v421
    %574 = vmatpush2.bf16.msra.mxu0 %v420
    %575 = vmatprep.subr.bf16.mxu0 %v417
    %576 = vmatpush2.bf16.msra.mxu0 %v416
    %577 = vmatprep.subr.bf16.mxu0 %v413
    %578 = vmatpush2.bf16.msra.mxu0 %v412
    %579 = vmatprep.mubr.bf16.mxu0 %v183
    %580 = vmatmul.mubr.bf16.gmra.mxu0 %v182
    %v581 = vpop.f32.mrf.mxu0
    %v582 = vadd.f32 %v170, %v581
    %v583 = vpop.f32.mrf.mxu0
    %v584 = vadd.f32 %v174, %v583
    %v585 = vpop.f32.mrf.mxu0
    %v586 = vpop.f32.mrf.mxu0
    %587 = vdwg.mxu0
    %v588 = vmax.f32 %v541, 0.0
    %v589 = vmax.f32 %v543, 0.0
    %v590 = vmax.f32 %v582, 0.0
    %v591 = vmax.f32 %v584, 0.0
    %v592 = vpack.c.bf16 %v588, %v588
    %v593 = vpack.c.bf16 %v589, %v589
    %v594 = vpack.c.bf16 %v590, %v590
    %v595 = vpack.c.bf16 %v591, %v591
    %v596 = vld [vmem:[#allocation8] sm:$0xff]
    %v597 = vld [vmem:[#allocation8 + $0x8] sm:$0xff]
    %v598 = vld [vmem:[#allocation8 + $0x10] sm:$0xff]
    %v599 = vld [vmem:[#allocation8 + $0x18] sm:$0xff]
    %v600 = vld [vmem:[#allocation8 + $0x20] sm:$0xff]
    %v601 = vld [vmem:[#allocation8 + $0x28] sm:$0xff]
    %v602 = vld [vmem:[#allocation8 + $0x30] sm:$0xff]
    %v603 = vld [vmem:[#allocation8 + $0x38] sm:$0xff]
    %v604 = vld [vmem:[#allocation8 + $0x40] sm:$0xff]
    %v605 = vld [vmem:[#allocation8 + $0x48] sm:$0xff]
    %v606 = vld [vmem:[#allocation8 + $0x50] sm:$0xff]
    %v607 = vld [vmem:[#allocation8 + $0x58] sm:$0xff]
    %v608 = vld [vmem:[#allocation8 + $0x60] sm:$0xff]
    %v609 = vld [vmem:[#allocation8 + $0x68] sm:$0xff]
    %v610 = vld [vmem:[#allocation8 + $0x70] sm:$0xff]
    %v611 = vld [vmem:[#allocation8 + $0x78] sm:$0xff]
    %v612 = vld [vmem:[#allocation8 + $0x80] sm:$0xff]
    %v613 = vld [vmem:[#allocation8 + $0x88] sm:$0xff]
    %v614 = vld [vmem:[#allocation8 + $0x90] sm:$0xff]
    %v615 = vld [vmem:[#allocation8 + $0x98] sm:$0xff]
    %v616 = vld [vmem:[#allocation8 + $0xa0] sm:$0xff]
    %v617 = vld [vmem:[#allocation8 + $0xa8] sm:$0xff]
    %v618 = vld [vmem:[#allocation8 + $0xb0] sm:$0xff]
    %v619 = vld [vmem:[#allocation8 + $0xb8] sm:$0xff]
    %v620 = vld [vmem:[#allocation8 + $0xc0] sm:$0xff]
    %v621 = vld [vmem:[#allocation8 + $0xc8] sm:$0xff]
    %v622 = vld [vmem:[#allocation8 + $0xd0] sm:$0xff]
    %v623 = vld [vmem:[#allocation8 + $0xd8] sm:$0xff]
    %v624 = vld [vmem:[#allocation8 + $0xe0] sm:$0xff]
    %v625 = vld [vmem:[#allocation8 + $0xe8] sm:$0xff]
    %v626 = vld [vmem:[#allocation8 + $0xf0] sm:$0xff]
    %v627 = vld [vmem:[#allocation8 + $0xf8] sm:$0xff]
    %v628 = vld [vmem:[#allocation8 + $0x100] sm:$0xff]
    %v629 = vld [vmem:[#allocation8 + $0x108] sm:$0xff]
    %v630 = vld [vmem:[#allocation8 + $0x110] sm:$0xff]
    %v631 = vld [vmem:[#allocation8 + $0x118] sm:$0xff]
    %v632 = vld [vmem:[#allocation8 + $0x120] sm:$0xff]
    %v633 = vld [vmem:[#allocation8 + $0x128] sm:$0xff]
    %v634 = vld [vmem:[#allocation8 + $0x130] sm:$0xff]
    %v635 = vld [vmem:[#allocation8 + $0x138] sm:$0xff]
    %v636 = vld [vmem:[#allocation8 + $0x140] sm:$0xff]
    %v637 = vld [vmem:[#allocation8 + $0x148] sm:$0xff]
    %v638 = vld [vmem:[#allocation8 + $0x150] sm:$0xff]
    %v639 = vld [vmem:[#allocation8 + $0x158] sm:$0xff]
    %v640 = vld [vmem:[#allocation8 + $0x160] sm:$0xff]
    %v641 = vld [vmem:[#allocation8 + $0x168] sm:$0xff]
    %v642 = vld [vmem:[#allocation8 + $0x170] sm:$0xff]
    %v643 = vld [vmem:[#allocation8 + $0x178] sm:$0xff]
    %v644 = vld [vmem:[#allocation8 + $0x180] sm:$0xff]
    %v645 = vld [vmem:[#allocation8 + $0x188] sm:$0xff]
    %v646 = vld [vmem:[#allocation8 + $0x190] sm:$0xff]
    %v647 = vld [vmem:[#allocation8 + $0x198] sm:$0xff]
    %v648 = vld [vmem:[#allocation8 + $0x1a0] sm:$0xff]
    %v649 = vld [vmem:[#allocation8 + $0x1a8] sm:$0xff]
    %v650 = vld [vmem:[#allocation8 + $0x1b0] sm:$0xff]
    %v651 = vld [vmem:[#allocation8 + $0x1b8] sm:$0xff]
    %v652 = vld [vmem:[#allocation8 + $0x1c0] sm:$0xff]
    %v653 = vld [vmem:[#allocation8 + $0x1c8] sm:$0xff]
    %v654 = vld [vmem:[#allocation8 + $0x1d0] sm:$0xff]
    %v655 = vld [vmem:[#allocation8 + $0x1d8] sm:$0xff]
    %v656 = vld [vmem:[#allocation8 + $0x1e0] sm:$0xff]
    %v657 = vld [vmem:[#allocation8 + $0x1e8] sm:$0xff]
    %v658 = vld [vmem:[#allocation8 + $0x1f0] sm:$0xff]
    %v659 = vld [vmem:[#allocation8 + $0x1f8] sm:$0xff]
    %v660 = vld [vmem:[#allocation8 + $0x200] sm:$0xff]
    %v661 = vld [vmem:[#allocation8 + $0x208] sm:$0xff]
    %v662 = vld [vmem:[#allocation8 + $0x210] sm:$0xff]
    %v663 = vld [vmem:[#allocation8 + $0x218] sm:$0xff]
    %v664 = vld [vmem:[#allocation8 + $0x220] sm:$0xff]
    %v665 = vld [vmem:[#allocation8 + $0x228] sm:$0xff]
    %v666 = vld [vmem:[#allocation8 + $0x230] sm:$0xff]
    %v667 = vld [vmem:[#allocation8 + $0x238] sm:$0xff]
    %v668 = vld [vmem:[#allocation8 + $0x240] sm:$0xff]
    %v669 = vld [vmem:[#allocation8 + $0x248] sm:$0xff]
    %v670 = vld [vmem:[#allocation8 + $0x250] sm:$0xff]
    %v671 = vld [vmem:[#allocation8 + $0x258] sm:$0xff]
    %v672 = vld [vmem:[#allocation8 + $0x260] sm:$0xff]
    %v673 = vld [vmem:[#allocation8 + $0x268] sm:$0xff]
    %v674 = vld [vmem:[#allocation8 + $0x270] sm:$0xff]
    %v675 = vld [vmem:[#allocation8 + $0x278] sm:$0xff]
    %v676 = vld [vmem:[#allocation8 + $0x280] sm:$0xff]
    %v677 = vld [vmem:[#allocation8 + $0x288] sm:$0xff]
    %v678 = vld [vmem:[#allocation8 + $0x290] sm:$0xff]
    %v679 = vld [vmem:[#allocation8 + $0x298] sm:$0xff]
    %v680 = vld [vmem:[#allocation8 + $0x2a0] sm:$0xff]
    %v681 = vld [vmem:[#allocation8 + $0x2a8] sm:$0xff]
    %v682 = vld [vmem:[#allocation8 + $0x2b0] sm:$0xff]
    %v683 = vld [vmem:[#allocation8 + $0x2b8] sm:$0xff]
    %v684 = vld [vmem:[#allocation8 + $0x2c0] sm:$0xff]
    %v685 = vld [vmem:[#allocation8 + $0x2c8] sm:$0xff]
    %v686 = vld [vmem:[#allocation8 + $0x2d0] sm:$0xff]
    %v687 = vld [vmem:[#allocation8 + $0x2d8] sm:$0xff]
    %v688 = vld [vmem:[#allocation8 + $0x2e0] sm:$0xff]
    %v689 = vld [vmem:[#allocation8 + $0x2e8] sm:$0xff]
    %v690 = vld [vmem:[#allocation8 + $0x2f0] sm:$0xff]
    %v691 = vld [vmem:[#allocation8 + $0x2f8] sm:$0xff]
    %v692 = vld [vmem:[#allocation8 + $0x300] sm:$0xff]
    %v693 = vld [vmem:[#allocation8 + $0x308] sm:$0xff]
    %v694 = vld [vmem:[#allocation8 + $0x310] sm:$0xff]
    %v695 = vld [vmem:[#allocation8 + $0x318] sm:$0xff]
    %v696 = vld [vmem:[#allocation8 + $0x320] sm:$0xff]
    %v697 = vld [vmem:[#allocation8 + $0x328] sm:$0xff]
    %v698 = vld [vmem:[#allocation8 + $0x330] sm:$0xff]
    %v699 = vld [vmem:[#allocation8 + $0x338] sm:$0xff]
    %v700 = vld [vmem:[#allocation8 + $0x340] sm:$0xff]
    %v701 = vld [vmem:[#allocation8 + $0x348] sm:$0xff]
    %v702 = vld [vmem:[#allocation8 + $0x350] sm:$0xff]
    %v703 = vld [vmem:[#allocation8 + $0x358] sm:$0xff]
    %v704 = vld [vmem:[#allocation8 + $0x360] sm:$0xff]
    %v705 = vld [vmem:[#allocation8 + $0x368] sm:$0xff]
    %v706 = vld [vmem:[#allocation8 + $0x370] sm:$0xff]
    %v707 = vld [vmem:[#allocation8 + $0x378] sm:$0xff]
    %v708 = vld [vmem:[#allocation8 + $0x380] sm:$0xff]
    %v709 = vld [vmem:[#allocation8 + $0x388] sm:$0xff]
    %v710 = vld [vmem:[#allocation8 + $0x390] sm:$0xff]
    %v711 = vld [vmem:[#allocation8 + $0x398] sm:$0xff]
    %v712 = vld [vmem:[#allocation8 + $0x3a0] sm:$0xff]
    %v713 = vld [vmem:[#allocation8 + $0x3a8] sm:$0xff]
    %v714 = vld [vmem:[#allocation8 + $0x3b0] sm:$0xff]
    %v715 = vld [vmem:[#allocation8 + $0x3b8] sm:$0xff]
    %v716 = vld [vmem:[#allocation8 + $0x3c0] sm:$0xff]
    %v717 = vld [vmem:[#allocation8 + $0x3c8] sm:$0xff]
    %v718 = vld [vmem:[#allocation8 + $0x3d0] sm:$0xff]
    %v719 = vld [vmem:[#allocation8 + $0x3d8] sm:$0xff]
    %v720 = vld [vmem:[#allocation8 + $0x3e0] sm:$0xff]
    %v721 = vld [vmem:[#allocation8 + $0x3e8] sm:$0xff]
    %v722 = vld [vmem:[#allocation8 + $0x3f0] sm:$0xff]
    %v723 = vld [vmem:[#allocation8 + $0x3f8] sm:$0xff]
    %v724 = vld [vmem:[%s4] sm:$0xf]
    %v726 = vlaneseq
    %v727 = vshrl.u32 %v726, 7
    %v728 = vsub.s32 0, %v727
    %v729 = vrot.slane %v724, %v728
    %v730 = vlaneseq
    %v731 = vshrl.u32 %v730, 7
    %v732 = vsub.s32 1, %v731
    %v733 = vrot.slane %v724, %v732
    %v734 = vlaneseq
    %v735 = vshrl.u32 %v734, 7
    %v736 = vsub.s32 2, %v735
    %v737 = vrot.slane %v724, %v736
    %v738 = vlaneseq
    %v739 = vshrl.u32 %v738, 7
    %v740 = vsub.s32 3, %v739
    %v741 = vrot.slane %v724, %v740
    %v874 = vunpack.c.l.b16 %v596
    %v875 = vunpack.c.h.b16 %v596
    %v876 = vunpack.c.l.b16 %v597
    %v877 = vunpack.c.h.b16 %v597
    %v878 = vunpack.c.l.b16 %v598
    %v879 = vunpack.c.h.b16 %v598
    %v880 = vunpack.c.l.b16 %v599
    %v881 = vunpack.c.h.b16 %v599
    %v882 = vunpack.c.l.b16 %v600
    %v883 = vunpack.c.h.b16 %v600
    %v884 = vunpack.c.l.b16 %v601
    %v885 = vunpack.c.h.b16 %v601
    %v886 = vunpack.c.l.b16 %v602
    %v887 = vunpack.c.h.b16 %v602
    %v888 = vunpack.c.l.b16 %v603
    %v889 = vunpack.c.h.b16 %v603
    %v890 = vunpack.c.l.b16 %v604
    %v891 = vunpack.c.h.b16 %v604
    %v892 = vunpack.c.l.b16 %v605
    %v893 = vunpack.c.h.b16 %v605
    %v894 = vunpack.c.l.b16 %v606
    %v895 = vunpack.c.h.b16 %v606
    %v896 = vunpack.c.l.b16 %v607
    %v897 = vunpack.c.h.b16 %v607
    %v898 = vunpack.c.l.b16 %v608
    %v899 = vunpack.c.h.b16 %v608
    %v900 = vunpack.c.l.b16 %v609
    %v901 = vunpack.c.h.b16 %v609
    %v902 = vunpack.c.l.b16 %v610
    %v903 = vunpack.c.h.b16 %v610
    %v904 = vunpack.c.l.b16 %v611
    %v905 = vunpack.c.h.b16 %v611
    %v906 = vunpack.c.l.b16 %v612
    %v907 = vunpack.c.h.b16 %v612
    %v908 = vunpack.c.l.b16 %v613
    %v909 = vunpack.c.h.b16 %v613
    %v910 = vunpack.c.l.b16 %v614
    %v911 = vunpack.c.h.b16 %v614
    %v912 = vunpack.c.l.b16 %v615
    %v913 = vunpack.c.h.b16 %v615
    %v914 = vunpack.c.l.b16 %v616
    %v915 = vunpack.c.h.b16 %v616
    %v916 = vunpack.c.l.b16 %v617
    %v917 = vunpack.c.h.b16 %v617
    %v918 = vunpack.c.l.b16 %v618
    %v919 = vunpack.c.h.b16 %v618
    %v920 = vunpack.c.l.b16 %v619
    %v921 = vunpack.c.h.b16 %v619
    %v922 = vunpack.c.l.b16 %v620
    %v923 = vunpack.c.h.b16 %v620
    %v924 = vunpack.c.l.b16 %v621
    %v925 = vunpack.c.h.b16 %v621
    %v926 = vunpack.c.l.b16 %v622
    %v927 = vunpack.c.h.b16 %v622
    %v928 = vunpack.c.l.b16 %v623
    %v929 = vunpack.c.h.b16 %v623
    %v930 = vunpack.c.l.b16 %v624
    %v931 = vunpack.c.h.b16 %v624
    %v932 = vunpack.c.l.b16 %v625
    %v933 = vunpack.c.h.b16 %v625
    %v934 = vunpack.c.l.b16 %v626
    %v935 = vunpack.c.h.b16 %v626
    %v936 = vunpack.c.l.b16 %v627
    %v937 = vunpack.c.h.b16 %v627
    %v938 = vunpack.c.l.b16 %v628
    %v939 = vunpack.c.h.b16 %v628
    %v940 = vunpack.c.l.b16 %v629
    %v941 = vunpack.c.h.b16 %v629
    %v942 = vunpack.c.l.b16 %v630
    %v943 = vunpack.c.h.b16 %v630
    %v944 = vunpack.c.l.b16 %v631
    %v945 = vunpack.c.h.b16 %v631
    %v946 = vunpack.c.l.b16 %v632
    %v947 = vunpack.c.h.b16 %v632
    %v948 = vunpack.c.l.b16 %v633
    %v949 = vunpack.c.h.b16 %v633
    %v950 = vunpack.c.l.b16 %v634
    %v951 = vunpack.c.h.b16 %v634
    %v952 = vunpack.c.l.b16 %v635
    %v953 = vunpack.c.h.b16 %v635
    %v954 = vunpack.c.l.b16 %v636
    %v955 = vunpack.c.h.b16 %v636
    %v956 = vunpack.c.l.b16 %v637
    %v957 = vunpack.c.h.b16 %v637
    %v958 = vunpack.c.l.b16 %v638
    %v959 = vunpack.c.h.b16 %v638
    %v960 = vunpack.c.l.b16 %v639
    %v961 = vunpack.c.h.b16 %v639
    %v962 = vunpack.c.l.b16 %v640
    %v963 = vunpack.c.h.b16 %v640
    %v964 = vunpack.c.l.b16 %v641
    %v965 = vunpack.c.h.b16 %v641
    %v966 = vunpack.c.l.b16 %v642
    %v967 = vunpack.c.h.b16 %v642
    %v968 = vunpack.c.l.b16 %v643
    %v969 = vunpack.c.h.b16 %v643
    %v970 = vunpack.c.l.b16 %v644
    %v971 = vunpack.c.h.b16 %v644
    %v972 = vunpack.c.l.b16 %v645
    %v973 = vunpack.c.h.b16 %v645
    %v974 = vunpack.c.l.b16 %v646
    %v975 = vunpack.c.h.b16 %v646
    %v976 = vunpack.c.l.b16 %v647
    %v977 = vunpack.c.h.b16 %v647
    %v978 = vunpack.c.l.b16 %v648
    %v979 = vunpack.c.h.b16 %v648
    %v980 = vunpack.c.l.b16 %v649
    %v981 = vunpack.c.h.b16 %v649
    %v982 = vunpack.c.l.b16 %v650
    %v983 = vunpack.c.h.b16 %v650
    %v984 = vunpack.c.l.b16 %v651
    %v985 = vunpack.c.h.b16 %v651
    %v986 = vunpack.c.l.b16 %v652
    %v987 = vunpack.c.h.b16 %v652
    %v988 = vunpack.c.l.b16 %v653
    %v989 = vunpack.c.h.b16 %v653
    %v990 = vunpack.c.l.b16 %v654
    %v991 = vunpack.c.h.b16 %v654
    %v992 = vunpack.c.l.b16 %v655
    %v993 = vunpack.c.h.b16 %v655
    %v994 = vunpack.c.l.b16 %v656
    %v995 = vunpack.c.h.b16 %v656
    %v996 = vunpack.c.l.b16 %v657
    %v997 = vunpack.c.h.b16 %v657
    %v998 = vunpack.c.l.b16 %v658
    %v999 = vunpack.c.h.b16 %v658
    %v1000 = vunpack.c.l.b16 %v659
    %v1001 = vunpack.c.h.b16 %v659
    %v1002 = vunpack.c.l.b16 %v660
    %v1003 = vunpack.c.h.b16 %v660
    %v1004 = vunpack.c.l.b16 %v661
    %v1005 = vunpack.c.h.b16 %v661
    %v1006 = vunpack.c.l.b16 %v662
    %v1007 = vunpack.c.h.b16 %v662
    %v1008 = vunpack.c.l.b16 %v663
    %v1009 = vunpack.c.h.b16 %v663
    %v1010 = vunpack.c.l.b16 %v664
    %v1011 = vunpack.c.h.b16 %v664
    %v1012 = vunpack.c.l.b16 %v665
    %v1013 = vunpack.c.h.b16 %v665
    %v1014 = vunpack.c.l.b16 %v666
    %v1015 = vunpack.c.h.b16 %v666
    %v1016 = vunpack.c.l.b16 %v667
    %v1017 = vunpack.c.h.b16 %v667
    %v1018 = vunpack.c.l.b16 %v668
    %v1019 = vunpack.c.h.b16 %v668
    %v1020 = vunpack.c.l.b16 %v669
    %v1021 = vunpack.c.h.b16 %v669
    %v1022 = vunpack.c.l.b16 %v670
    %v1023 = vunpack.c.h.b16 %v670
    %v1024 = vunpack.c.l.b16 %v671
    %v1025 = vunpack.c.h.b16 %v671
    %v1026 = vunpack.c.l.b16 %v672
    %v1027 = vunpack.c.h.b16 %v672
    %v1028 = vunpack.c.l.b16 %v673
    %v1029 = vunpack.c.h.b16 %v673
    %v1030 = vunpack.c.l.b16 %v674
    %v1031 = vunpack.c.h.b16 %v674
    %v1032 = vunpack.c.l.b16 %v675
    %v1033 = vunpack.c.h.b16 %v675
    %v1034 = vunpack.c.l.b16 %v676
    %v1035 = vunpack.c.h.b16 %v676
    %v1036 = vunpack.c.l.b16 %v677
    %v1037 = vunpack.c.h.b16 %v677
    %v1038 = vunpack.c.l.b16 %v678
    %v1039 = vunpack.c.h.b16 %v678
    %v1040 = vunpack.c.l.b16 %v679
    %v1041 = vunpack.c.h.b16 %v679
    %v1042 = vunpack.c.l.b16 %v680
    %v1043 = vunpack.c.h.b16 %v680
    %v1044 = vunpack.c.l.b16 %v681
    %v1045 = vunpack.c.h.b16 %v681
    %v1046 = vunpack.c.l.b16 %v682
    %v1047 = vunpack.c.h.b16 %v682
    %v1048 = vunpack.c.l.b16 %v683
    %v1049 = vunpack.c.h.b16 %v683
    %v1050 = vunpack.c.l.b16 %v684
    %v1051 = vunpack.c.h.b16 %v684
    %v1052 = vunpack.c.l.b16 %v685
    %v1053 = vunpack.c.h.b16 %v685
    %v1054 = vunpack.c.l.b16 %v686
    %v1055 = vunpack.c.h.b16 %v686
    %v1056 = vunpack.c.l.b16 %v687
    %v1057 = vunpack.c.h.b16 %v687
    %v1058 = vunpack.c.l.b16 %v688
    %v1059 = vunpack.c.h.b16 %v688
    %v1060 = vunpack.c.l.b16 %v689
    %v1061 = vunpack.c.h.b16 %v689
    %v1062 = vunpack.c.l.b16 %v690
    %v1063 = vunpack.c.h.b16 %v690
    %v1064 = vunpack.c.l.b16 %v691
    %v1065 = vunpack.c.h.b16 %v691
    %v1066 = vunpack.c.l.b16 %v692
    %v1067 = vunpack.c.h.b16 %v692
    %v1068 = vunpack.c.l.b16 %v693
    %v1069 = vunpack.c.h.b16 %v693
    %v1070 = vunpack.c.l.b16 %v694
    %v1071 = vunpack.c.h.b16 %v694
    %v1072 = vunpack.c.l.b16 %v695
    %v1073 = vunpack.c.h.b16 %v695
    %v1074 = vunpack.c.l.b16 %v696
    %v1075 = vunpack.c.h.b16 %v696
    %v1076 = vunpack.c.l.b16 %v697
    %v1077 = vunpack.c.h.b16 %v697
    %v1078 = vunpack.c.l.b16 %v698
    %v1079 = vunpack.c.h.b16 %v698
    %v1080 = vunpack.c.l.b16 %v699
    %v1081 = vunpack.c.h.b16 %v699
    %v1082 = vunpack.c.l.b16 %v700
    %v1083 = vunpack.c.h.b16 %v700
    %v1084 = vunpack.c.l.b16 %v701
    %v1085 = vunpack.c.h.b16 %v701
    %v1086 = vunpack.c.l.b16 %v702
    %v1087 = vunpack.c.h.b16 %v702
    %v1088 = vunpack.c.l.b16 %v703
    %v1089 = vunpack.c.h.b16 %v703
    %v1090 = vunpack.c.l.b16 %v704
    %v1091 = vunpack.c.h.b16 %v704
    %v1092 = vunpack.c.l.b16 %v705
    %v1093 = vunpack.c.h.b16 %v705
    %v1094 = vunpack.c.l.b16 %v706
    %v1095 = vunpack.c.h.b16 %v706
    %v1096 = vunpack.c.l.b16 %v707
    %v1097 = vunpack.c.h.b16 %v707
    %v1098 = vunpack.c.l.b16 %v708
    %v1099 = vunpack.c.h.b16 %v708
    %v1100 = vunpack.c.l.b16 %v709
    %v1101 = vunpack.c.h.b16 %v709
    %v1102 = vunpack.c.l.b16 %v710
    %v1103 = vunpack.c.h.b16 %v710
    %v1104 = vunpack.c.l.b16 %v711
    %v1105 = vunpack.c.h.b16 %v711
    %v1106 = vunpack.c.l.b16 %v712
    %v1107 = vunpack.c.h.b16 %v712
    %v1108 = vunpack.c.l.b16 %v713
    %v1109 = vunpack.c.h.b16 %v713
    %v1110 = vunpack.c.l.b16 %v714
    %v1111 = vunpack.c.h.b16 %v714
    %v1112 = vunpack.c.l.b16 %v715
    %v1113 = vunpack.c.h.b16 %v715
    %v1114 = vunpack.c.l.b16 %v716
    %v1115 = vunpack.c.h.b16 %v716
    %v1116 = vunpack.c.l.b16 %v717
    %v1117 = vunpack.c.h.b16 %v717
    %v1118 = vunpack.c.l.b16 %v718
    %v1119 = vunpack.c.h.b16 %v718
    %v1120 = vunpack.c.l.b16 %v719
    %v1121 = vunpack.c.h.b16 %v719
    %v1122 = vunpack.c.l.b16 %v720
    %v1123 = vunpack.c.h.b16 %v720
    %v1124 = vunpack.c.l.b16 %v721
    %v1125 = vunpack.c.h.b16 %v721
    %v1126 = vunpack.c.l.b16 %v722
    %v1127 = vunpack.c.h.b16 %v722
    %v1128 = vunpack.c.l.b16 %v723
    %v1129 = vunpack.c.h.b16 %v723
    %v1130 = vpack.c.b16 %v878, %v874
    %v1131 = vpack.c.b16 %v879, %v875
    %v1132 = vpack.c.b16 %v880, %v876
    %v1133 = vpack.c.b16 %v881, %v877
    %v1134 = vpack.c.b16 %v886, %v882
    %v1135 = vpack.c.b16 %v887, %v883
    %v1136 = vpack.c.b16 %v888, %v884
    %v1137 = vpack.c.b16 %v889, %v885
    %v1138 = vpack.c.b16 %v894, %v890
    %v1139 = vpack.c.b16 %v895, %v891
    %v1140 = vpack.c.b16 %v896, %v892
    %v1141 = vpack.c.b16 %v897, %v893
    %v1142 = vpack.c.b16 %v902, %v898
    %v1143 = vpack.c.b16 %v903, %v899
    %v1144 = vpack.c.b16 %v904, %v900
    %v1145 = vpack.c.b16 %v905, %v901
    %v1146 = vpack.c.b16 %v910, %v906
    %v1147 = vpack.c.b16 %v911, %v907
    %v1148 = vpack.c.b16 %v912, %v908
    %v1149 = vpack.c.b16 %v913, %v909
    %v1150 = vpack.c.b16 %v918, %v914
    %v1151 = vpack.c.b16 %v919, %v915
    %v1152 = vpack.c.b16 %v920, %v916
    %v1153 = vpack.c.b16 %v921, %v917
    %v1154 = vpack.c.b16 %v926, %v922
    %v1155 = vpack.c.b16 %v927, %v923
    %v1156 = vpack.c.b16 %v928, %v924
    %v1157 = vpack.c.b16 %v929, %v925
    %v1158 = vpack.c.b16 %v934, %v930
    %v1159 = vpack.c.b16 %v935, %v931
    %v1160 = vpack.c.b16 %v936, %v932
    %v1161 = vpack.c.b16 %v937, %v933
    %v1162 = vpack.c.b16 %v942, %v938
    %v1163 = vpack.c.b16 %v943, %v939
    %v1164 = vpack.c.b16 %v944, %v940
    %v1165 = vpack.c.b16 %v945, %v941
    %v1166 = vpack.c.b16 %v950, %v946
    %v1167 = vpack.c.b16 %v951, %v947
    %v1168 = vpack.c.b16 %v952, %v948
    %v1169 = vpack.c.b16 %v953, %v949
    %v1170 = vpack.c.b16 %v958, %v954
    %v1171 = vpack.c.b16 %v959, %v955
    %v1172 = vpack.c.b16 %v960, %v956
    %v1173 = vpack.c.b16 %v961, %v957
    %v1174 = vpack.c.b16 %v966, %v962
    %v1175 = vpack.c.b16 %v967, %v963
    %v1176 = vpack.c.b16 %v968, %v964
    %v1177 = vpack.c.b16 %v969, %v965
    %v1178 = vpack.c.b16 %v974, %v970
    %v1179 = vpack.c.b16 %v975, %v971
    %v1180 = vpack.c.b16 %v976, %v972
    %v1181 = vpack.c.b16 %v977, %v973
    %v1182 = vpack.c.b16 %v982, %v978
    %v1183 = vpack.c.b16 %v983, %v979
    %v1184 = vpack.c.b16 %v984, %v980
    %v1185 = vpack.c.b16 %v985, %v981
    %v1186 = vpack.c.b16 %v990, %v986
    %v1187 = vpack.c.b16 %v991, %v987
    %v1188 = vpack.c.b16 %v992, %v988
    %v1189 = vpack.c.b16 %v993, %v989
    %v1190 = vpack.c.b16 %v998, %v994
    %v1191 = vpack.c.b16 %v999, %v995
    %v1192 = vpack.c.b16 %v1000, %v996
    %v1193 = vpack.c.b16 %v1001, %v997
    %v1194 = vpack.c.b16 %v1006, %v1002
    %v1195 = vpack.c.b16 %v1007, %v1003
    %v1196 = vpack.c.b16 %v1008, %v1004
    %v1197 = vpack.c.b16 %v1009, %v1005
    %v1198 = vpack.c.b16 %v1014, %v1010
    %v1199 = vpack.c.b16 %v1015, %v1011
    %v1200 = vpack.c.b16 %v1016, %v1012
    %v1201 = vpack.c.b16 %v1017, %v1013
    %v1202 = vpack.c.b16 %v1022, %v1018
    %v1203 = vpack.c.b16 %v1023, %v1019
    %v1204 = vpack.c.b16 %v1024, %v1020
    %v1205 = vpack.c.b16 %v1025, %v1021
    %v1206 = vpack.c.b16 %v1030, %v1026
    %v1207 = vpack.c.b16 %v1031, %v1027
    %v1208 = vpack.c.b16 %v1032, %v1028
    %v1209 = vpack.c.b16 %v1033, %v1029
    %v1210 = vpack.c.b16 %v1038, %v1034
    %v1211 = vpack.c.b16 %v1039, %v1035
    %v1212 = vpack.c.b16 %v1040, %v1036
    %v1213 = vpack.c.b16 %v1041, %v1037
    %v1214 = vpack.c.b16 %v1046, %v1042
    %v1215 = vpack.c.b16 %v1047, %v1043
    %v1216 = vpack.c.b16 %v1048, %v1044
    %v1217 = vpack.c.b16 %v1049, %v1045
    %v1218 = vpack.c.b16 %v1054, %v1050
    %v1219 = vpack.c.b16 %v1055, %v1051
    %v1220 = vpack.c.b16 %v1056, %v1052
    %v1221 = vpack.c.b16 %v1057, %v1053
    %v1222 = vpack.c.b16 %v1062, %v1058
    %v1223 = vpack.c.b16 %v1063, %v1059
    %v1224 = vpack.c.b16 %v1064, %v1060
    %v1225 = vpack.c.b16 %v1065, %v1061
    %v1226 = vpack.c.b16 %v1070, %v1066
    %v1227 = vpack.c.b16 %v1071, %v1067
    %v1228 = vpack.c.b16 %v1072, %v1068
    %v1229 = vpack.c.b16 %v1073, %v1069
    %v1230 = vpack.c.b16 %v1078, %v1074
    %v1231 = vpack.c.b16 %v1079, %v1075
    %v1232 = vpack.c.b16 %v1080, %v1076
    %v1233 = vpack.c.b16 %v1081, %v1077
    %v1234 = vpack.c.b16 %v1086, %v1082
    %v1235 = vpack.c.b16 %v1087, %v1083
    %v1236 = vpack.c.b16 %v1088, %v1084
    %v1237 = vpack.c.b16 %v1089, %v1085
    %v1238 = vpack.c.b16 %v1094, %v1090
    %v1239 = vpack.c.b16 %v1095, %v1091
    %v1240 = vpack.c.b16 %v1096, %v1092
    %v1241 = vpack.c.b16 %v1097, %v1093
    %v1242 = vpack.c.b16 %v1102, %v1098
    %v1243 = vpack.c.b16 %v1103, %v1099
    %v1244 = vpack.c.b16 %v1104, %v1100
    %v1245 = vpack.c.b16 %v1105, %v1101
    %v1246 = vpack.c.b16 %v1110, %v1106
    %v1247 = vpack.c.b16 %v1111, %v1107
    %v1248 = vpack.c.b16 %v1112, %v1108
    %v1249 = vpack.c.b16 %v1113, %v1109
    %v1250 = vpack.c.b16 %v1118, %v1114
    %v1251 = vpack.c.b16 %v1119, %v1115
    %v1252 = vpack.c.b16 %v1120, %v1116
    %v1253 = vpack.c.b16 %v1121, %v1117
    %v1254 = vpack.c.b16 %v1126, %v1122
    %v1255 = vpack.c.b16 %v1127, %v1123
    %v1256 = vpack.c.b16 %v1128, %v1124
    %v1257 = vpack.c.b16 %v1129, %v1125
    %1386 = vmatprep.subr.bf16.mxu0 %v1159
    %1387 = vmatpush1.bf16.msra.mxu0 %v1158
    %1388 = vmatprep.subr.bf16.mxu0 %v1155
    %1389 = vmatpush1.bf16.msra.mxu0 %v1154
    %1390 = vmatprep.subr.bf16.mxu0 %v1151
    %1391 = vmatpush1.bf16.msra.mxu0 %v1150
    %1392 = vmatprep.subr.bf16.mxu0 %v1147
    %1393 = vmatpush1.bf16.msra.mxu0 %v1146
    %1394 = vmatprep.subr.bf16.mxu0 %v1143
    %1395 = vmatpush1.bf16.msra.mxu0 %v1142
    %1396 = vmatprep.subr.bf16.mxu0 %v1139
    %1397 = vmatpush1.bf16.msra.mxu0 %v1138
    %1398 = vmatprep.subr.bf16.mxu0 %v1135
    %1399 = vmatpush1.bf16.msra.mxu0 %v1134
    %1400 = vmatprep.subr.bf16.mxu0 %v1131
    %1401 = vmatpush1.bf16.msra.mxu0 %v1130
    %1402 = vmatprep.subr.bf16.mxu0 %v1191
    %1403 = vmatpush2.bf16.msra.mxu0 %v1190
    %1404 = vmatprep.subr.bf16.mxu0 %v1187
    %1405 = vmatpush2.bf16.msra.mxu0 %v1186
    %1406 = vmatprep.subr.bf16.mxu0 %v1183
    %1407 = vmatpush2.bf16.msra.mxu0 %v1182
    %1408 = vmatprep.subr.bf16.mxu0 %v1179
    %1409 = vmatpush2.bf16.msra.mxu0 %v1178
    %1410 = vmatprep.subr.bf16.mxu0 %v1175
    %1411 = vmatpush2.bf16.msra.mxu0 %v1174
    %1412 = vmatprep.subr.bf16.mxu0 %v1171
    %1413 = vmatpush2.bf16.msra.mxu0 %v1170
    %1414 = vmatprep.subr.bf16.mxu0 %v1167
    %1415 = vmatpush2.bf16.msra.mxu0 %v1166
    %1416 = vmatprep.subr.bf16.mxu0 %v1163
    %1417 = vmatpush2.bf16.msra.mxu0 %v1162
    %1418 = vmatprep.mubr.bf16.mxu0 %v593
    %1419 = vmatmul.mubr.bf16.gmra.mxu0 %v592
    %v1420 = vpop.f32.mrf.mxu0
    %v1421 = vadd.f32 %v729, %v1420
    %v1422 = vpop.f32.mrf.mxu0
    %v1423 = vadd.f32 %v733, %v1422
    %v1424 = vpop.f32.mrf.mxu0
    %v1425 = vpop.f32.mrf.mxu0
    %1426 = vdwg.mxu0
    %1427 = vmatprep.subr.bf16.mxu0 %v1223
    %1428 = vmatpush1.bf16.msra.mxu0 %v1222
    %1429 = vmatprep.subr.bf16.mxu0 %v1219
    %1430 = vmatpush1.bf16.msra.mxu0 %v1218
    %1431 = vmatprep.subr.bf16.mxu0 %v1215
    %1432 = vmatpush1.bf16.msra.mxu0 %v1214
    %1433 = vmatprep.subr.bf16.mxu0 %v1211
    %1434 = vmatpush1.bf16.msra.mxu0 %v1210
    %1435 = vmatprep.subr.bf16.mxu0 %v1207
    %1436 = vmatpush1.bf16.msra.mxu0 %v1206
    %1437 = vmatprep.subr.bf16.mxu0 %v1203
    %1438 = vmatpush1.bf16.msra.mxu0 %v1202
    %1439 = vmatprep.subr.bf16.mxu0 %v1199
    %1440 = vmatpush1.bf16.msra.mxu0 %v1198
    %1441 = vmatprep.subr.bf16.mxu0 %v1195
    %1442 = vmatpush1.bf16.msra.mxu0 %v1194
    %1443 = vmatprep.subr.bf16.mxu0 %v1255
    %1444 = vmatpush2.bf16.msra.mxu0 %v1254
    %1445 = vmatprep.subr.bf16.mxu0 %v1251
    %1446 = vmatpush2.bf16.msra.mxu0 %v1250
    %1447 = vmatprep.subr.bf16.mxu0 %v1247
    %1448 = vmatpush2.bf16.msra.mxu0 %v1246
    %1449 = vmatprep.subr.bf16.mxu0 %v1243
    %1450 = vmatpush2.bf16.msra.mxu0 %v1242
    %1451 = vmatprep.subr.bf16.mxu0 %v1239
    %1452 = vmatpush2.bf16.msra.mxu0 %v1238
    %1453 = vmatprep.subr.bf16.mxu0 %v1235
    %1454 = vmatpush2.bf16.msra.mxu0 %v1234
    %1455 = vmatprep.subr.bf16.mxu0 %v1231
    %1456 = vmatpush2.bf16.msra.mxu0 %v1230
    %1457 = vmatprep.subr.bf16.mxu0 %v1227
    %1458 = vmatpush2.bf16.msra.mxu0 %v1226
    %1459 = vmatprep.mubr.bf16.mxu0 %v595
    %1460 = vmatmul.mubr.bf16.gmra.mxu0 %v594
    %v1461 = vpop.f32.mrf.mxu0
    %v1462 = vadd.f32 %v1421, %v1461
    %v1463 = vpop.f32.mrf.mxu0
    %v1464 = vadd.f32 %v1423, %v1463
    %v1465 = vpop.f32.mrf.mxu0
    %v1466 = vpop.f32.mrf.mxu0
    %1467 = vdwg.mxu0
    %1468 = vmatprep.subr.bf16.mxu0 %v1161
    %1469 = vmatpush1.bf16.msra.mxu0 %v1160
    %1470 = vmatprep.subr.bf16.mxu0 %v1157
    %1471 = vmatpush1.bf16.msra.mxu0 %v1156
    %1472 = vmatprep.subr.bf16.mxu0 %v1153
    %1473 = vmatpush1.bf16.msra.mxu0 %v1152
    %1474 = vmatprep.subr.bf16.mxu0 %v1149
    %1475 = vmatpush1.bf16.msra.mxu0 %v1148
    %1476 = vmatprep.subr.bf16.mxu0 %v1145
    %1477 = vmatpush1.bf16.msra.mxu0 %v1144
    %1478 = vmatprep.subr.bf16.mxu0 %v1141
    %1479 = vmatpush1.bf16.msra.mxu0 %v1140
    %1480 = vmatprep.subr.bf16.mxu0 %v1137
    %1481 = vmatpush1.bf16.msra.mxu0 %v1136
    %1482 = vmatprep.subr.bf16.mxu0 %v1133
    %1483 = vmatpush1.bf16.msra.mxu0 %v1132
    %1484 = vmatprep.subr.bf16.mxu0 %v1193
    %1485 = vmatpush2.bf16.msra.mxu0 %v1192
    %1486 = vmatprep.subr.bf16.mxu0 %v1189
    %1487 = vmatpush2.bf16.msra.mxu0 %v1188
    %1488 = vmatprep.subr.bf16.mxu0 %v1185
    %1489 = vmatpush2.bf16.msra.mxu0 %v1184
    %1490 = vmatprep.subr.bf16.mxu0 %v1181
    %1491 = vmatpush2.bf16.msra.mxu0 %v1180
    %1492 = vmatprep.subr.bf16.mxu0 %v1177
    %1493 = vmatpush2.bf16.msra.mxu0 %v1176
    %1494 = vmatprep.subr.bf16.mxu0 %v1173
    %1495 = vmatpush2.bf16.msra.mxu0 %v1172
    %1496 = vmatprep.subr.bf16.mxu0 %v1169
    %1497 = vmatpush2.bf16.msra.mxu0 %v1168
    %1498 = vmatprep.subr.bf16.mxu0 %v1165
    %1499 = vmatpush2.bf16.msra.mxu0 %v1164
    %1500 = vmatprep.mubr.bf16.mxu0 %v593
    %1501 = vmatmul.mubr.bf16.gmra.mxu0 %v592
    %v1502 = vpop.f32.mrf.mxu0
    %v1503 = vadd.f32 %v737, %v1502
    %v1504 = vpop.f32.mrf.mxu0
    %v1505 = vadd.f32 %v741, %v1504
    %v1506 = vpop.f32.mrf.mxu0
    %v1507 = vpop.f32.mrf.mxu0
    %1508 = vdwg.mxu0
    %1509 = vmatprep.subr.bf16.mxu0 %v1225
    %1510 = vmatpush1.bf16.msra.mxu0 %v1224
    %1511 = vmatprep.subr.bf16.mxu0 %v1221
    %1512 = vmatpush1.bf16.msra.mxu0 %v1220
    %1513 = vmatprep.subr.bf16.mxu0 %v1217
    %1514 = vmatpush1.bf16.msra.mxu0 %v1216
    %1515 = vmatprep.subr.bf16.mxu0 %v1213
    %1516 = vmatpush1.bf16.msra.mxu0 %v1212
    %1517 = vmatprep.subr.bf16.mxu0 %v1209
    %1518 = vmatpush1.bf16.msra.mxu0 %v1208
    %1519 = vmatprep.subr.bf16.mxu0 %v1205
    %1520 = vmatpush1.bf16.msra.mxu0 %v1204
    %1521 = vmatprep.subr.bf16.mxu0 %v1201
    %1522 = vmatpush1.bf16.msra.mxu0 %v1200
    %1523 = vmatprep.subr.bf16.mxu0 %v1197
    %1524 = vmatpush1.bf16.msra.mxu0 %v1196
    %1525 = vmatprep.subr.bf16.mxu0 %v1257
    %1526 = vmatpush2.bf16.msra.mxu0 %v1256
    %1527 = vmatprep.subr.bf16.mxu0 %v1253
    %1528 = vmatpush2.bf16.msra.mxu0 %v1252
    %1529 = vmatprep.subr.bf16.mxu0 %v1249
    %1530 = vmatpush2.bf16.msra.mxu0 %v1248
    %1531 = vmatprep.subr.bf16.mxu0 %v1245
    %1532 = vmatpush2.bf16.msra.mxu0 %v1244
    %1533 = vmatprep.subr.bf16.mxu0 %v1241
    %1534 = vmatpush2.bf16.msra.mxu0 %v1240
    %1535 = vmatprep.subr.bf16.mxu0 %v1237
    %1536 = vmatpush2.bf16.msra.mxu0 %v1236
    %1537 = vmatprep.subr.bf16.mxu0 %v1233
    %1538 = vmatpush2.bf16.msra.mxu0 %v1232
    %1539 = vmatprep.subr.bf16.mxu0 %v1229
    %1540 = vmatpush2.bf16.msra.mxu0 %v1228
    %1541 = vmatprep.mubr.bf16.mxu0 %v595
    %1542 = vmatmul.mubr.bf16.gmra.mxu0 %v594
    %v1543 = vpop.f32.mrf.mxu0
    %v1544 = vadd.f32 %v1503, %v1543
    %v1545 = vpop.f32.mrf.mxu0
    %v1546 = vadd.f32 %v1505, %v1545
    %v1547 = vpop.f32.mrf.mxu0
    %v1548 = vpop.f32.mrf.mxu0
    %1549 = vdwg.mxu0
    %v1550 = vmax.f32 %v1462, 0.0
    %v1551 = vmax.f32 %v1464, 0.0
    %v1552 = vmax.f32 %v1544, 0.0
    %v1553 = vmax.f32 %v1546, 0.0
    %v1554 = vpack.c.bf16 %v1550, %v1550
    %v1555 = vpack.c.bf16 %v1551, %v1551
    %v1556 = vpack.c.bf16 %v1552, %v1552
    %v1557 = vpack.c.bf16 %v1553, %v1553
    %v1558 = vld [vmem:[#allocation10] sm:$0xf]
    %v1559 = vld [vmem:[#allocation10 + $0x4] sm:$0xf]
    %v1560 = vld [vmem:[#allocation10 + $0x8] sm:$0xf]
    %v1561 = vld [vmem:[#allocation10 + $0xc] sm:$0xf]
    %v1562 = vld [vmem:[#allocation10 + $0x10] sm:$0xf]
    %v1563 = vld [vmem:[#allocation10 + $0x14] sm:$0xf]
    %v1564 = vld [vmem:[#allocation10 + $0x18] sm:$0xf]
    %v1565 = vld [vmem:[#allocation10 + $0x1c] sm:$0xf]
    %v1566 = vld [vmem:[#allocation10 + $0x20] sm:$0xf]
    %v1567 = vld [vmem:[#allocation10 + $0x24] sm:$0xf]
    %v1568 = vld [vmem:[#allocation10 + $0x28] sm:$0xf]
    %v1569 = vld [vmem:[#allocation10 + $0x2c] sm:$0xf]
    %v1570 = vld [vmem:[#allocation10 + $0x30] sm:$0xf]
    %v1571 = vld [vmem:[#allocation10 + $0x34] sm:$0xf]
    %v1572 = vld [vmem:[#allocation10 + $0x38] sm:$0xf]
    %v1573 = vld [vmem:[#allocation10 + $0x3c] sm:$0xf]
    %v1574 = vld [vmem:[#allocation10 + $0x40] sm:$0xf]
    %v1575 = vld [vmem:[#allocation10 + $0x44] sm:$0xf]
    %v1576 = vld [vmem:[#allocation10 + $0x48] sm:$0xf]
    %v1577 = vld [vmem:[#allocation10 + $0x4c] sm:$0xf]
    %v1578 = vld [vmem:[#allocation10 + $0x50] sm:$0xf]
    %v1579 = vld [vmem:[#allocation10 + $0x54] sm:$0xf]
    %v1580 = vld [vmem:[#allocation10 + $0x58] sm:$0xf]
    %v1581 = vld [vmem:[#allocation10 + $0x5c] sm:$0xf]
    %v1582 = vld [vmem:[#allocation10 + $0x60] sm:$0xf]
    %v1583 = vld [vmem:[#allocation10 + $0x64] sm:$0xf]
    %v1584 = vld [vmem:[#allocation10 + $0x68] sm:$0xf]
    %v1585 = vld [vmem:[#allocation10 + $0x6c] sm:$0xf]
    %v1586 = vld [vmem:[#allocation10 + $0x70] sm:$0xf]
    %v1587 = vld [vmem:[#allocation10 + $0x74] sm:$0xf]
    %v1588 = vld [vmem:[#allocation10 + $0x78] sm:$0xf]
    %v1589 = vld [vmem:[#allocation10 + $0x7c] sm:$0xf]
    %v1590 = vld [vmem:[#allocation10 + $0x80] sm:$0xf]
    %v1591 = vld [vmem:[#allocation10 + $0x84] sm:$0xf]
    %v1592 = vld [vmem:[#allocation10 + $0x88] sm:$0xf]
    %v1593 = vld [vmem:[#allocation10 + $0x8c] sm:$0xf]
    %v1594 = vld [vmem:[#allocation10 + $0x90] sm:$0xf]
    %v1595 = vld [vmem:[#allocation10 + $0x94] sm:$0xf]
    %v1596 = vld [vmem:[#allocation10 + $0x98] sm:$0xf]
    %v1597 = vld [vmem:[#allocation10 + $0x9c] sm:$0xf]
    %v1598 = vld [vmem:[#allocation10 + $0xa0] sm:$0xf]
    %v1599 = vld [vmem:[#allocation10 + $0xa4] sm:$0xf]
    %v1600 = vld [vmem:[#allocation10 + $0xa8] sm:$0xf]
    %v1601 = vld [vmem:[#allocation10 + $0xac] sm:$0xf]
    %v1602 = vld [vmem:[#allocation10 + $0xb0] sm:$0xf]
    %v1603 = vld [vmem:[#allocation10 + $0xb4] sm:$0xf]
    %v1604 = vld [vmem:[#allocation10 + $0xb8] sm:$0xf]
    %v1605 = vld [vmem:[#allocation10 + $0xbc] sm:$0xf]
    %v1606 = vld [vmem:[#allocation10 + $0xc0] sm:$0xf]
    %v1607 = vld [vmem:[#allocation10 + $0xc4] sm:$0xf]
    %v1608 = vld [vmem:[#allocation10 + $0xc8] sm:$0xf]
    %v1609 = vld [vmem:[#allocation10 + $0xcc] sm:$0xf]
    %v1610 = vld [vmem:[#allocation10 + $0xd0] sm:$0xf]
    %v1611 = vld [vmem:[#allocation10 + $0xd4] sm:$0xf]
    %v1612 = vld [vmem:[#allocation10 + $0xd8] sm:$0xf]
    %v1613 = vld [vmem:[#allocation10 + $0xdc] sm:$0xf]
    %v1614 = vld [vmem:[#allocation10 + $0xe0] sm:$0xf]
    %v1615 = vld [vmem:[#allocation10 + $0xe4] sm:$0xf]
    %v1616 = vld [vmem:[#allocation10 + $0xe8] sm:$0xf]
    %v1617 = vld [vmem:[#allocation10 + $0xec] sm:$0xf]
    %v1618 = vld [vmem:[#allocation10 + $0xf0] sm:$0xf]
    %v1619 = vld [vmem:[#allocation10 + $0xf4] sm:$0xf]
    %v1620 = vld [vmem:[#allocation10 + $0xf8] sm:$0xf]
    %v1621 = vld [vmem:[#allocation10 + $0xfc] sm:$0xf]
    %v1622 = vld [vmem:[%s6] sm:$0x1]
    %v1624 = vlaneseq
    %v1625 = vshrl.u32 %v1624, 7
    %v1626 = vsub.s32 0, %v1625
    %v1627 = vrot.slane %v1622, %v1626
    %v1693 = vunpack.c.l.b16 %v1558
    %v1694 = vunpack.c.l.b16 %v1559
    %v1695 = vunpack.c.l.b16 %v1560
    %v1696 = vunpack.c.l.b16 %v1561
    %v1697 = vunpack.c.l.b16 %v1562
    %v1698 = vunpack.c.l.b16 %v1563
    %v1699 = vunpack.c.l.b16 %v1564
    %v1700 = vunpack.c.l.b16 %v1565
    %v1701 = vunpack.c.l.b16 %v1566
    %v1702 = vunpack.c.l.b16 %v1567
    %v1703 = vunpack.c.l.b16 %v1568
    %v1704 = vunpack.c.l.b16 %v1569
    %v1705 = vunpack.c.l.b16 %v1570
    %v1706 = vunpack.c.l.b16 %v1571
    %v1707 = vunpack.c.l.b16 %v1572
    %v1708 = vunpack.c.l.b16 %v1573
    %v1709 = vunpack.c.l.b16 %v1574
    %v1710 = vunpack.c.l.b16 %v1575
    %v1711 = vunpack.c.l.b16 %v1576
    %v1712 = vunpack.c.l.b16 %v1577
    %v1713 = vunpack.c.l.b16 %v1578
    %v1714 = vunpack.c.l.b16 %v1579
    %v1715 = vunpack.c.l.b16 %v1580
    %v1716 = vunpack.c.l.b16 %v1581
    %v1717 = vunpack.c.l.b16 %v1582
    %v1718 = vunpack.c.l.b16 %v1583
    %v1719 = vunpack.c.l.b16 %v1584
    %v1720 = vunpack.c.l.b16 %v1585
    %v1721 = vunpack.c.l.b16 %v1586
    %v1722 = vunpack.c.l.b16 %v1587
    %v1723 = vunpack.c.l.b16 %v1588
    %v1724 = vunpack.c.l.b16 %v1589
    %v1725 = vunpack.c.l.b16 %v1590
    %v1726 = vunpack.c.l.b16 %v1591
    %v1727 = vunpack.c.l.b16 %v1592
    %v1728 = vunpack.c.l.b16 %v1593
    %v1729 = vunpack.c.l.b16 %v1594
    %v1730 = vunpack.c.l.b16 %v1595
    %v1731 = vunpack.c.l.b16 %v1596
    %v1732 = vunpack.c.l.b16 %v1597
    %v1733 = vunpack.c.l.b16 %v1598
    %v1734 = vunpack.c.l.b16 %v1599
    %v1735 = vunpack.c.l.b16 %v1600
    %v1736 = vunpack.c.l.b16 %v1601
    %v1737 = vunpack.c.l.b16 %v1602
    %v1738 = vunpack.c.l.b16 %v1603
    %v1739 = vunpack.c.l.b16 %v1604
    %v1740 = vunpack.c.l.b16 %v1605
    %v1741 = vunpack.c.l.b16 %v1606
    %v1742 = vunpack.c.l.b16 %v1607
    %v1743 = vunpack.c.l.b16 %v1608
    %v1744 = vunpack.c.l.b16 %v1609
    %v1745 = vunpack.c.l.b16 %v1610
    %v1746 = vunpack.c.l.b16 %v1611
    %v1747 = vunpack.c.l.b16 %v1612
    %v1748 = vunpack.c.l.b16 %v1613
    %v1749 = vunpack.c.l.b16 %v1614
    %v1750 = vunpack.c.l.b16 %v1615
    %v1751 = vunpack.c.l.b16 %v1616
    %v1752 = vunpack.c.l.b16 %v1617
    %v1753 = vunpack.c.l.b16 %v1618
    %v1754 = vunpack.c.l.b16 %v1619
    %v1755 = vunpack.c.l.b16 %v1620
    %v1756 = vunpack.c.l.b16 %v1621
    %v1757 = vpack.c.b16 %v1694, %v1693
    %v1758 = vpack.c.b16 %v1696, %v1695
    %v1759 = vpack.c.b16 %v1698, %v1697
    %v1760 = vpack.c.b16 %v1700, %v1699
    %v1761 = vpack.c.b16 %v1702, %v1701
    %v1762 = vpack.c.b16 %v1704, %v1703
    %v1763 = vpack.c.b16 %v1706, %v1705
    %v1764 = vpack.c.b16 %v1708, %v1707
    %v1765 = vpack.c.b16 %v1710, %v1709
    %v1766 = vpack.c.b16 %v1712, %v1711
    %v1767 = vpack.c.b16 %v1714, %v1713
    %v1768 = vpack.c.b16 %v1716, %v1715
    %v1769 = vpack.c.b16 %v1718, %v1717
    %v1770 = vpack.c.b16 %v1720, %v1719
    %v1771 = vpack.c.b16 %v1722, %v1721
    %v1772 = vpack.c.b16 %v1724, %v1723
    %v1773 = vpack.c.b16 %v1726, %v1725
    %v1774 = vpack.c.b16 %v1728, %v1727
    %v1775 = vpack.c.b16 %v1730, %v1729
    %v1776 = vpack.c.b16 %v1732, %v1731
    %v1777 = vpack.c.b16 %v1734, %v1733
    %v1778 = vpack.c.b16 %v1736, %v1735
    %v1779 = vpack.c.b16 %v1738, %v1737
    %v1780 = vpack.c.b16 %v1740, %v1739
    %v1781 = vpack.c.b16 %v1742, %v1741
    %v1782 = vpack.c.b16 %v1744, %v1743
    %v1783 = vpack.c.b16 %v1746, %v1745
    %v1784 = vpack.c.b16 %v1748, %v1747
    %v1785 = vpack.c.b16 %v1750, %v1749
    %v1786 = vpack.c.b16 %v1752, %v1751
    %v1787 = vpack.c.b16 %v1754, %v1753
    %v1788 = vpack.c.b16 %v1756, %v1755
    %1821 = vmatprep.subr.bf16.mxu0 0
    %1822 = vmatpush1.bf16.msra.mxu0 %v1764
    %1823 = vmatprep.subr.bf16.mxu0 0
    %1824 = vmatpush1.bf16.msra.mxu0 %v1763
    %1825 = vmatprep.subr.bf16.mxu0 0
    %1826 = vmatpush1.bf16.msra.mxu0 %v1762
    %1827 = vmatprep.subr.bf16.mxu0 0
    %1828 = vmatpush1.bf16.msra.mxu0 %v1761
    %1829 = vmatprep.subr.bf16.mxu0 0
    %1830 = vmatpush1.bf16.msra.mxu0 %v1760
    %1831 = vmatprep.subr.bf16.mxu0 0
    %1832 = vmatpush1.bf16.msra.mxu0 %v1759
    %1833 = vmatprep.subr.bf16.mxu0 0
    %1834 = vmatpush1.bf16.msra.mxu0 %v1758
    %1835 = vmatprep.subr.bf16.mxu0 0
    %1836 = vmatpush1.bf16.msra.mxu0 %v1757
    %1837 = vmatprep.subr.bf16.mxu0 0
    %1838 = vmatpush2.bf16.msra.mxu0 %v1772
    %1839 = vmatprep.subr.bf16.mxu0 0
    %1840 = vmatpush2.bf16.msra.mxu0 %v1771
    %1841 = vmatprep.subr.bf16.mxu0 0
    %1842 = vmatpush2.bf16.msra.mxu0 %v1770
    %1843 = vmatprep.subr.bf16.mxu0 0
    %1844 = vmatpush2.bf16.msra.mxu0 %v1769
    %1845 = vmatprep.subr.bf16.mxu0 0
    %1846 = vmatpush2.bf16.msra.mxu0 %v1768
    %1847 = vmatprep.subr.bf16.mxu0 0
    %1848 = vmatpush2.bf16.msra.mxu0 %v1767
    %1849 = vmatprep.subr.bf16.mxu0 0
    %1850 = vmatpush2.bf16.msra.mxu0 %v1766
    %1851 = vmatprep.subr.bf16.mxu0 0
    %1852 = vmatpush2.bf16.msra.mxu0 %v1765
    %1853 = vmatprep.mubr.bf16.mxu0 %v1555
    %1854 = vmatmul.mubr.bf16.gmra.mxu0 %v1554
    %v1855 = vpop.f32.mrf.mxu0
    %v1856 = vadd.f32 %v1627, %v1855
    %v1857 = vpop.f32.mrf.mxu0
    %v1858 = vpop.f32.mrf.mxu0
    %v1859 = vpop.f32.mrf.mxu0
    %1860 = vdwg.mxu0
    %1861 = vmatprep.subr.bf16.mxu0 0
    %1862 = vmatpush1.bf16.msra.mxu0 %v1780
    %1863 = vmatprep.subr.bf16.mxu0 0
    %1864 = vmatpush1.bf16.msra.mxu0 %v1779
    %1865 = vmatprep.subr.bf16.mxu0 0
    %1866 = vmatpush1.bf16.msra.mxu0 %v1778
    %1867 = vmatprep.subr.bf16.mxu0 0
    %1868 = vmatpush1.bf16.msra.mxu0 %v1777
    %1869 = vmatprep.subr.bf16.mxu0 0
    %1870 = vmatpush1.bf16.msra.mxu0 %v1776
    %1871 = vmatprep.subr.bf16.mxu0 0
    %1872 = vmatpush1.bf16.msra.mxu0 %v1775
    %1873 = vmatprep.subr.bf16.mxu0 0
    %1874 = vmatpush1.bf16.msra.mxu0 %v1774
    %1875 = vmatprep.subr.bf16.mxu0 0
    %1876 = vmatpush1.bf16.msra.mxu0 %v1773
    %1877 = vmatprep.subr.bf16.mxu0 0
    %1878 = vmatpush2.bf16.msra.mxu0 %v1788
    %1879 = vmatprep.subr.bf16.mxu0 0
    %1880 = vmatpush2.bf16.msra.mxu0 %v1787
    %1881 = vmatprep.subr.bf16.mxu0 0
    %1882 = vmatpush2.bf16.msra.mxu0 %v1786
    %1883 = vmatprep.subr.bf16.mxu0 0
    %1884 = vmatpush2.bf16.msra.mxu0 %v1785
    %1885 = vmatprep.subr.bf16.mxu0 0
    %1886 = vmatpush2.bf16.msra.mxu0 %v1784
    %1887 = vmatprep.subr.bf16.mxu0 0
    %1888 = vmatpush2.bf16.msra.mxu0 %v1783
    %1889 = vmatprep.subr.bf16.mxu0 0
    %1890 = vmatpush2.bf16.msra.mxu0 %v1782
    %1891 = vmatprep.subr.bf16.mxu0 0
    %1892 = vmatpush2.bf16.msra.mxu0 %v1781
    %1893 = vmatprep.mubr.bf16.mxu0 %v1557
    %1894 = vmatmul.mubr.bf16.gmra.mxu0 %v1556
    %v1895 = vpop.f32.mrf.mxu0
    %v1896 = vadd.f32 %v1856, %v1895
    %v1897 = vpop.f32.mrf.mxu0
    %v1898 = vpop.f32.mrf.mxu0
    %v1899 = vpop.f32.mrf.mxu0
    %1900 = vdwg.mxu0
    %1901 = vst [vmem:[#allocation11] sm:$0xff] %v1896
    // Predicated region
    $region50: #{tpu_custom_call.1} parent=1 // pred_check
      _
    $region51: #{tpu_custom_call.1} parent=1 // pred_check_branch
      %1903 = sbr.rel (0) target = $region53
    $region52: #{tpu_custom_call.1} parent=1 // pred_region
      %s1905 = ssub.s32 128, 128
      %1906 = vsyncadd [#allocation4], %s1905
      %s1908 = sshll.u32 [#allocation11], 4
      %s1909 = int_to_ptr.vmem [resolvable:$true] %s1908
      %1911 = dma.vmem_to_hbm [thread:$0]  %s1909, 128, %s7, [#allocation4]
    $region53: #{tpu_custom_call.1} parent=1 // pred_fallthru
      _
    // Predicated region
    $region54: #{tpu_custom_call.1} parent=1 // pred_check
      _
    $region55: #{tpu_custom_call.1} parent=1 // pred_check_branch
      %1913 = sbr.rel (0) target = $region57
    $region56: #{tpu_custom_call.1} parent=1 // pred_region
      %1914 = dma.done [#allocation4], 128
    $region57: #{tpu_custom_call.1} parent=1 // pred_fallthru
      _
    %1915 = vsyncpa [#allocation3], 1
    %1916 = vsyncpa [#allocation6], 1
    %1917 = vsyncpa [#allocation9], 1
    %1918 = vsyncpa [#allocation4], 1

</llo_original>
